<compile_context>
chip_gen: v6e
topology: v6e:2x2x1
jax: 0.10.0
libtpu: 0.0.40
codegen_flags: <defaults>
</compile_context>

<pallas_src>
import jax
import jax.numpy as jnp
from jax.experimental import pallas as pl
from jax.experimental.pallas import tpu as pltpu

BN_EPS = 1e-5
D_IN, D_H1, D_H2 = 128, 1024, 256


def _bn_relu_from_moments(h, mu, var, gamma, beta):
    h = (h - mu) * jax.lax.rsqrt(var + BN_EPS) * gamma + beta
    return jnp.maximum(h, 0.0)


# ---------------------------------------------------------------------------
# Path 1: whole batch resident in VMEM (small B).  Exact centered variance.
# ---------------------------------------------------------------------------
def _domain_clf_kernel(x_ref, w1_ref, g1_ref, beta1_ref,
                       w2_ref, g2_ref, beta2_ref, w3_ref, b3_ref, o_ref):
    # GRF forward is the identity.  Cast x f32 -> bf16 on the VPU (free slot).
    x = x_ref[...].astype(jnp.bfloat16)                                  # (B, 128)
    inv_b = 1.0 / x.shape[0]

    # Linear(128->1024) [b1 cancelled by training-mode BN] + BN + ReLU
    h1 = jnp.dot(x, w1_ref[...], preferred_element_type=jnp.float32)    # (B, 1024) f32
    mu1 = jnp.sum(h1, axis=0, keepdims=True) * inv_b
    d1 = h1 - mu1
    var1 = jnp.sum(d1 * d1, axis=0, keepdims=True) * inv_b              # biased, centered
    h1 = _bn_relu_from_moments(h1, mu1, var1, g1_ref[...], beta1_ref[...])
    h1 = h1.astype(jnp.bfloat16)

    # Linear(1024->256) [b2 cancelled] + BN + ReLU
    h2 = jnp.dot(h1, w2_ref[...], preferred_element_type=jnp.float32)   # (B, 256) f32
    mu2 = jnp.sum(h2, axis=0, keepdims=True) * inv_b
    d2 = h2 - mu2
    var2 = jnp.sum(d2 * d2, axis=0, keepdims=True) * inv_b
    h2 = _bn_relu_from_moments(h2, mu2, var2, g2_ref[...], beta2_ref[...])

    # Linear(256->1): VPU broadcast-mul + lane reduce (no implicit h2 transpose,
    # no N=1 MXU matmul); b3 is a scalar in SMEM.
    w3 = w3_ref[...].astype(jnp.float32)                                 # (1, 256)
    out = jnp.sum(h2 * w3, axis=-1, keepdims=True) + b3_ref[0, 0]        # (B, 1)
    o_ref[...] = out.astype(o_ref.dtype)


# ---------------------------------------------------------------------------
# Path 2: batch-tiled 3-phase grid (large B).  Weights VMEM-resident across
# all grid steps; BN moments accumulated in small VMEM scratch.
# ---------------------------------------------------------------------------
def _make_tiled_kernel(total_b):
    inv_b = 1.0 / total_b

    def kernel(x_ref, w1_ref, g1_ref, beta1_ref, w2_ref, g2_ref, beta2_ref,
               w3_ref, b3_ref, o_ref, s1_sum, s1_sq, s2_sum, s2_sq):
        phase = pl.program_id(0)
        step = pl.program_id(1)

        @pl.when((phase == 0) & (step == 0))
        def _():
            s1_sum[...] = jnp.zeros_like(s1_sum)
            s1_sq[...] = jnp.zeros_like(s1_sq)
            s2_sum[...] = jnp.zeros_like(s2_sum)
            s2_sq[...] = jnp.zeros_like(s2_sq)

        def lin1():
            x = x_ref[...].astype(jnp.bfloat16)
            return jnp.dot(x, w1_ref[...], preferred_element_type=jnp.float32)

        def bn_relu(h, sum_ref, sq_ref, g_ref, beta_ref):
            mu = sum_ref[...] * inv_b
            # TODO(synk): switch to a Welford/chunk-combined accumulator if the
            # E[h^2]-mu^2 form ever becomes an accuracy issue for BN stats.
            var = jnp.maximum(sq_ref[...] * inv_b - mu * mu, 0.0)
            return _bn_relu_from_moments(h, mu, var, g_ref[...], beta_ref[...])

        @pl.when(phase == 0)     # pass 1: batch moments of h1 = x @ w1
        def _():
            h1 = lin1()
            s1_sum[...] += jnp.sum(h1, axis=0, keepdims=True)
            s1_sq[...] += jnp.sum(h1 * h1, axis=0, keepdims=True)

        @pl.when(phase == 1)     # pass 2: batch moments of h2 = relu(BN(h1)) @ w2
        def _():
            h1 = bn_relu(lin1(), s1_sum, s1_sq, g1_ref, beta1_ref).astype(jnp.bfloat16)
            h2 = jnp.dot(h1, w2_ref[...], preferred_element_type=jnp.float32)
            s2_sum[...] += jnp.sum(h2, axis=0, keepdims=True)
            s2_sq[...] += jnp.sum(h2 * h2, axis=0, keepdims=True)

        @pl.when(phase == 2)     # pass 3: normalized full forward + store
        def _():
            h1 = bn_relu(lin1(), s1_sum, s1_sq, g1_ref, beta1_ref).astype(jnp.bfloat16)
            h2 = jnp.dot(h1, w2_ref[...], preferred_element_type=jnp.float32)
            h2 = bn_relu(h2, s2_sum, s2_sq, g2_ref, beta2_ref)
            w3 = w3_ref[...].astype(jnp.float32)
            out = jnp.sum(h2 * w3, axis=-1, keepdims=True) + b3_ref[0, 0]
            o_ref[...] = out.astype(o_ref.dtype)

    return kernel


# ---------------------------------------------------------------------------
# Wrappers
# ---------------------------------------------------------------------------
def _vmem_limit_bytes(resident_rows):
    """VMEM limit derived from resident row count, capped to the queried
    per-generation capacity (v7x: 64 MiB physical; v5e/v6e: 128 MiB)."""
    try:
        cap = int(pltpu.get_tpu_info().vmem_capacity_bytes)
    except Exception:
        cap = 64 * 1024 * 1024  # conservative default (v7x)
    weights = 2 * ((D_IN * D_H1 + D_H1 * D_H2 + D_H2) * 2 + (D_H1 + D_H2) * 2 * 4)
    per_row = D_IN * 4 + D_H1 * (4 + 2) + D_H2 * (4 + 2) + 8
    need = int(1.25 * (weights + resident_rows * per_row)) + (4 << 20)
    return int(max(16 << 20, min(need, cap - (8 << 20))))


def _forward_resident(x, params):
    b = x.shape[0]
    vspec = pl.BlockSpec(memory_space=pltpu.MemorySpace.VMEM)
    sspec = pl.BlockSpec(memory_space=pltpu.MemorySpace.SMEM)
    flops = 2 * b * (D_IN * D_H1 + D_H1 * D_H2 + D_H2) + 12 * b * (D_H1 + D_H2)
    bytes_accessed = (b * D_IN * 4
                      + (D_IN * D_H1 + D_H1 * D_H2 + D_H2) * 2     # bf16 weights
                      + (D_H1 + D_H2) * 2 * 4 + 4                  # BN params + b3
                      + b * 4)                                      # output
    return pl.pallas_call(
        _domain_clf_kernel,
        out_shape=jax.ShapeDtypeStruct((b, 1), jnp.float32),
        in_specs=[vspec] * 8 + [sspec],
        out_specs=vspec,
        compiler_params=pltpu.CompilerParams(vmem_limit_bytes=_vmem_limit_bytes(b)),
        cost_estimate=pl.CostEstimate(flops=flops, transcendentals=D_H1 + D_H2,
                                      bytes_accessed=bytes_accessed),
    )(x, params["w1"], params["g1"], params["beta1"],
      params["w2"], params["g2"], params["beta2"],
      params["w3"], params["b3"])


def _forward_tiled(x, params, tile_b):
    b = x.shape[0]
    n_tiles = b // tile_b
    const = lambda p, i: (0, 0)
    grid_spec = pltpu.PrefetchScalarGridSpec(
        num_scalar_prefetch=0,
        grid=(3, n_tiles),                                          # (phase, batch tile)
        in_specs=[
            pl.BlockSpec((tile_b, D_IN), lambda p, i: (i, 0)),      # x (re-read per phase)
            pl.BlockSpec((D_IN, D_H1), const),                      # w1 (VMEM-resident)
            pl.BlockSpec((1, D_H1), const),                         # gamma1
            pl.BlockSpec((1, D_H1), const),                         # beta1
            pl.BlockSpec((D_H1, D_H2), const),                      # w2 (VMEM-resident)
            pl.BlockSpec((1, D_H2), const),                         # gamma2
            pl.BlockSpec((1, D_H2), const),                         # beta2
            pl.BlockSpec((1, D_H2), const),                         # w3 row
            pl.BlockSpec(memory_space=pltpu.MemorySpace.SMEM),      # b3 scalar
        ],
        out_specs=pl.BlockSpec((tile_b, 1), lambda p, i: (i, 0)),
        scratch_shapes=[pltpu.VMEM((1, D_H1), jnp.float32),         # sum(h1)
                        pltpu.VMEM((1, D_H1), jnp.float32),         # sum(h1^2)
                        pltpu.VMEM((1, D_H2), jnp.float32),         # sum(h2)
                        pltpu.VMEM((1, D_H2), jnp.float32)],        # sum(h2^2)
    )
    flops = 2 * b * (3 * D_IN * D_H1 + 2 * D_H1 * D_H2 + D_H2) + 24 * b * (D_H1 + D_H2)
    bytes_accessed = (3 * b * D_IN * 4
                      + (D_IN * D_H1 + D_H1 * D_H2 + D_H2) * 2
                      + (D_H1 + D_H2) * 2 * 4 + 4
                      + 3 * b * 4)
    return pl.pallas_call(
        _make_tiled_kernel(b),
        grid_spec=grid_spec,
        out_shape=jax.ShapeDtypeStruct((b, 1), jnp.float32),
        compiler_params=pltpu.CompilerParams(
            dimension_semantics=("arbitrary", "arbitrary"),
            vmem_limit_bytes=_vmem_limit_bytes(4 * tile_b)),
        cost_estimate=pl.CostEstimate(flops=flops, transcendentals=3 * D_H1 + 2 * D_H2,
                                      bytes_accessed=bytes_accessed),
    )(x, params["w1"], params["g1"], params["beta1"],
      params["w2"], params["g2"], params["beta2"],
      params["w3"], params["b3"])


def domain_classifier_forward(x, params, lambda_=1.0, *, tile_b=None):
    """Forward pass of DomainClassifier.  x: (B, 128) f32.

    lambda_ only affects the backward pass (GRF forward is the identity), so it
    is unused here.  tile_b forces the batch-tiled 3-phase path; by default the
    tiled path is chosen automatically for large B.
    """
    del lambda_  # GRF forward is identity; TODO(synk): custom_vjp for -lambda*grad.
    b = x.shape[0]
    if tile_b is None and b >= 1024:
        for cand in (512, 256, 128):
            if b % cand == 0:
                tile_b = cand
                break
    if tile_b is not None:
        if b % tile_b != 0 or tile_b % 8 != 0:
            raise ValueError(f"tile_b={tile_b} must divide B={b} and be a multiple of 8")
        return _forward_tiled(x, params, tile_b)
    return _forward_resident(x, params)


# ---------------------------------------------------------------------------
# Parameters + pure-JAX reference
# ---------------------------------------------------------------------------
def init_params(key):
    """Deterministic synthetic parameters matching the PyTorch module's shapes.

    PyTorch Linear stores weight as (out, in); here we store the transpose
    (in, out) in bf16 so the kernel computes x @ W directly on the MXU.
    b1/b2 are kept only for the reference (training-mode BN cancels them)."""
    ks = jax.random.split(key, 6)

    def lin(k, fan_in, fan_out):
        bound = 1.0 / jnp.sqrt(fan_in)
        kw, kb = jax.random.split(k)
        w = jax.random.uniform(kw, (fan_in, fan_out), jnp.float32, -bound, bound)
        b = jax.random.uniform(kb, (1, fan_out), jnp.float32, -bound, bound)
        return w, b

    w1, b1 = lin(ks[0], D_IN, D_H1)
    w2, b2 = lin(ks[1], D_H1, D_H2)
    w3, b3 = lin(ks[2], D_H2, 1)
    g1 = 1.0 + 0.01 * jax.random.normal(ks[3], (1, D_H1), jnp.float32)
    beta1 = 0.01 * jax.random.normal(ks[4], (1, D_H1), jnp.float32)
    g2 = 1.0 + 0.01 * jax.random.normal(ks[5], (1, D_H2), jnp.float32)
    beta2 = jnp.zeros((1, D_H2), jnp.float32)
    return {
        "w1": w1.astype(jnp.bfloat16), "b1": b1, "g1": g1, "beta1": beta1,
        "w2": w2.astype(jnp.bfloat16), "b2": b2, "g2": g2, "beta2": beta2,
        "w3": w3.T.reshape(1, D_H2).astype(jnp.bfloat16),
        "b3": b3.reshape(1, 1),
    }


def reference_forward(x, params):
    """Pure-JAX reference (bf16 matmuls, f32 BN, training-mode statistics).

    Includes b1/b2 before BN to show dropping them in the kernel is equivalent."""
    h = jnp.dot(x.astype(jnp.bfloat16), params["w1"],
                preferred_element_type=jnp.float32) + params["b1"]
    mu, var = jnp.mean(h, 0, keepdims=True), jnp.var(h, 0, keepdims=True)
    h = (h - mu) * jax.lax.rsqrt(var + BN_EPS) * params["g1"] + params["beta1"]
    h = jnp.maximum(h, 0.0).astype(jnp.bfloat16)

    h = jnp.dot(h, params["w2"],
                preferred_element_type=jnp.float32) + params["b2"]
    mu, var = jnp.mean(h, 0, keepdims=True), jnp.var(h, 0, keepdims=True)
    h = (h - mu) * jax.lax.rsqrt(var + BN_EPS) * params["g2"] + params["beta2"]
    h = jnp.maximum(h, 0.0)                      # keep f32 for the last layer (as kernel)

    return jnp.dot(h, params["w3"].astype(jnp.float32).T,
                   preferred_element_type=jnp.float32) + params["b3"]


if __name__ == "__main__":
    key = jax.random.PRNGKey(0)
    kx1, kx2, kp = jax.random.split(key, 3)
    params = init_params(kp)
    lambda_ = 0.5  # GRF coefficient; forward is identity, so unused in compute

    # Small batch -> whole-batch-resident kernel.
    b_small = 8
    x_small = jax.random.normal(kx1, (b_small, D_IN), jnp.float32)
    out_small = jax.block_until_ready(domain_classifier_forward(x_small, params, lambda_))
    ref_small = reference_forward(x_small, params)
    assert out_small.shape == (b_small, 1), out_small.shape
    assert jnp.allclose(out_small, ref_small, atol=2e-2, rtol=2e-2), (
        f"resident path max abs err {jnp.max(jnp.abs(out_small - ref_small))}")

    # Moderately larger batch forced through the batch-tiled 3-phase path.
    b_big, tile_b = 256, 128
    x_big = jax.random.normal(kx2, (b_big, D_IN), jnp.float32)
    out_big = jax.block_until_ready(
        domain_classifier_forward(x_big, params, lambda_, tile_b=tile_b))
    ref_big = reference_forward(x_big, params)
    assert out_big.shape == (b_big, 1), out_big.shape
    assert jnp.allclose(out_big, ref_big, atol=2e-2, rtol=2e-2), (
        f"tiled path max abs err {jnp.max(jnp.abs(out_big - ref_big))}")

    print("KERNEL_OK")
</pallas_src>

<mosaic_0001>
module attributes {stable_mosaic.version = 11 : i64} {
  func.func @_domain_clf_kernel(%arg0: memref<8x128xf32, #tpu.memory_space<vmem>>, %arg1: memref<128x1024xbf16, #tpu.memory_space<vmem>>, %arg2: memref<1x1024xf32, #tpu.memory_space<vmem>>, %arg3: memref<1x1024xf32, #tpu.memory_space<vmem>>, %arg4: memref<1024x256xbf16, #tpu.memory_space<vmem>>, %arg5: memref<1x256xf32, #tpu.memory_space<vmem>>, %arg6: memref<1x256xf32, #tpu.memory_space<vmem>>, %arg7: memref<1x256xbf16, #tpu.memory_space<vmem>>, %arg8: memref<1x1xf32, #tpu.memory_space<smem>>, %arg9: memref<8x1xf32, #tpu.memory_space<vmem>>) attributes {dimension_semantics = [], scalar_prefetch = 0 : i64, scratch_operands = 0 : i64, tpu.core_type = #tpu.core_type<tc>} {
    %c0 = arith.constant 0 : index
    %c0_0 = arith.constant 0 : index
    %0 = vector.load %arg0[%c0, %c0_0] : memref<8x128xf32, #tpu.memory_space<vmem>>, vector<8x128xf32>
    %1 = arith.truncf %0 : vector<8x128xf32> to vector<8x128xbf16>
    %c0_1 = arith.constant 0 : index
    %c0_2 = arith.constant 0 : index
    %2 = vector.load %arg1[%c0_1, %c0_2] : memref<128x1024xbf16, #tpu.memory_space<vmem>>, vector<128x1024xbf16>
    %cst = arith.constant dense<0.000000e+00> : vector<8x1024xf32>
    %3 = tpu.matmul %1, %2, %cst {dimension_numbers = #tpu.dot_dimension_numbers<[1], [0], [0], [1], [0, 0, 1, 1], [], []>} : vector<8x128xbf16>, vector<128x1024xbf16>, vector<8x1024xf32> -> vector<8x1024xf32>
    %cst_3 = arith.constant dense<0.000000e+00> : vector<1024xf32>
    %4 = vector.multi_reduction <add>, %3, %cst_3 [0] : vector<8x1024xf32> to vector<1024xf32>
    %5 = vector.shape_cast %4 : vector<1024xf32> to vector<1x1024xf32>
    %cst_4 = arith.constant 1.250000e-01 : f32
    %6 = vector.broadcast %cst_4 : f32 to vector<1x1024xf32>
    %7 = arith.mulf %5, %6 : vector<1x1024xf32>
    %8 = vector.broadcast %7 : vector<1x1024xf32> to vector<8x1024xf32>
    %9 = arith.subf %3, %8 : vector<8x1024xf32>
    %10 = arith.mulf %9, %9 : vector<8x1024xf32>
    %cst_5 = arith.constant dense<0.000000e+00> : vector<1024xf32>
    %11 = vector.multi_reduction <add>, %10, %cst_5 [0] : vector<8x1024xf32> to vector<1024xf32>
    %12 = vector.shape_cast %11 : vector<1024xf32> to vector<1x1024xf32>
    %cst_6 = arith.constant 1.250000e-01 : f32
    %13 = vector.broadcast %cst_6 : f32 to vector<1x1024xf32>
    %14 = arith.mulf %12, %13 : vector<1x1024xf32>
    %c0_7 = arith.constant 0 : index
    %c0_8 = arith.constant 0 : index
    %15 = vector.load %arg2[%c0_7, %c0_8] : memref<1x1024xf32, #tpu.memory_space<vmem>>, vector<1x1024xf32>
    %c0_9 = arith.constant 0 : index
    %c0_10 = arith.constant 0 : index
    %16 = vector.load %arg3[%c0_9, %c0_10] : memref<1x1024xf32, #tpu.memory_space<vmem>>, vector<1x1024xf32>
    %17 = vector.broadcast %7 : vector<1x1024xf32> to vector<8x1024xf32>
    %18 = arith.subf %3, %17 : vector<8x1024xf32>
    %cst_11 = arith.constant 9.99999974E-6 : f32
    %19 = vector.broadcast %cst_11 : f32 to vector<1x1024xf32>
    %20 = arith.addf %14, %19 : vector<1x1024xf32>
    %21 = math.rsqrt %20 : vector<1x1024xf32>
    %22 = vector.broadcast %21 : vector<1x1024xf32> to vector<8x1024xf32>
    %23 = arith.mulf %18, %22 : vector<8x1024xf32>
    %24 = vector.broadcast %15 : vector<1x1024xf32> to vector<8x1024xf32>
    %25 = arith.mulf %23, %24 : vector<8x1024xf32>
    %26 = vector.broadcast %16 : vector<1x1024xf32> to vector<8x1024xf32>
    %27 = arith.addf %25, %26 : vector<8x1024xf32>
    %cst_12 = arith.constant 0.000000e+00 : f32
    %28 = vector.broadcast %cst_12 : f32 to vector<8x1024xf32>
    %29 = arith.maximumf %27, %28 : vector<8x1024xf32>
    %30 = arith.truncf %29 : vector<8x1024xf32> to vector<8x1024xbf16>
    %c0_13 = arith.constant 0 : index
    %c0_14 = arith.constant 0 : index
    %31 = vector.load %arg4[%c0_13, %c0_14] : memref<1024x256xbf16, #tpu.memory_space<vmem>>, vector<1024x256xbf16>
    %cst_15 = arith.constant dense<0.000000e+00> : vector<8x256xf32>
    %32 = tpu.matmul %30, %31, %cst_15 {dimension_numbers = #tpu.dot_dimension_numbers<[1], [0], [0], [1], [0, 0, 1, 1], [], []>} : vector<8x1024xbf16>, vector<1024x256xbf16>, vector<8x256xf32> -> vector<8x256xf32>
    %cst_16 = arith.constant dense<0.000000e+00> : vector<256xf32>
    %33 = vector.multi_reduction <add>, %32, %cst_16 [0] : vector<8x256xf32> to vector<256xf32>
    %34 = vector.shape_cast %33 : vector<256xf32> to vector<1x256xf32>
    %cst_17 = arith.constant 1.250000e-01 : f32
    %35 = vector.broadcast %cst_17 : f32 to vector<1x256xf32>
    %36 = arith.mulf %34, %35 : vector<1x256xf32>
    %37 = vector.broadcast %36 : vector<1x256xf32> to vector<8x256xf32>
    %38 = arith.subf %32, %37 : vector<8x256xf32>
    %39 = arith.mulf %38, %38 : vector<8x256xf32>
    %cst_18 = arith.constant dense<0.000000e+00> : vector<256xf32>
    %40 = vector.multi_reduction <add>, %39, %cst_18 [0] : vector<8x256xf32> to vector<256xf32>
    %41 = vector.shape_cast %40 : vector<256xf32> to vector<1x256xf32>
    %cst_19 = arith.constant 1.250000e-01 : f32
    %42 = vector.broadcast %cst_19 : f32 to vector<1x256xf32>
    %43 = arith.mulf %41, %42 : vector<1x256xf32>
    %c0_20 = arith.constant 0 : index
    %c0_21 = arith.constant 0 : index
    %44 = vector.load %arg5[%c0_20, %c0_21] : memref<1x256xf32, #tpu.memory_space<vmem>>, vector<1x256xf32>
    %c0_22 = arith.constant 0 : index
    %c0_23 = arith.constant 0 : index
    %45 = vector.load %arg6[%c0_22, %c0_23] : memref<1x256xf32, #tpu.memory_space<vmem>>, vector<1x256xf32>
    %46 = vector.broadcast %36 : vector<1x256xf32> to vector<8x256xf32>
    %47 = arith.subf %32, %46 : vector<8x256xf32>
    %cst_24 = arith.constant 9.99999974E-6 : f32
    %48 = vector.broadcast %cst_24 : f32 to vector<1x256xf32>
    %49 = arith.addf %43, %48 : vector<1x256xf32>
    %50 = math.rsqrt %49 : vector<1x256xf32>
    %51 = vector.broadcast %50 : vector<1x256xf32> to vector<8x256xf32>
    %52 = arith.mulf %47, %51 : vector<8x256xf32>
    %53 = vector.broadcast %44 : vector<1x256xf32> to vector<8x256xf32>
    %54 = arith.mulf %52, %53 : vector<8x256xf32>
    %55 = vector.broadcast %45 : vector<1x256xf32> to vector<8x256xf32>
    %56 = arith.addf %54, %55 : vector<8x256xf32>
    %cst_25 = arith.constant 0.000000e+00 : f32
    %57 = vector.broadcast %cst_25 : f32 to vector<8x256xf32>
    %58 = arith.maximumf %56, %57 : vector<8x256xf32>
    %c0_26 = arith.constant 0 : index
    %c0_27 = arith.constant 0 : index
    %59 = vector.load %arg7[%c0_26, %c0_27] : memref<1x256xbf16, #tpu.memory_space<vmem>>, vector<1x256xbf16>
    %60 = arith.extf %59 : vector<1x256xbf16> to vector<1x256xf32>
    %61 = vector.broadcast %60 : vector<1x256xf32> to vector<8x256xf32>
    %62 = arith.mulf %58, %61 : vector<8x256xf32>
    %cst_28 = arith.constant dense<0.000000e+00> : vector<8xf32>
    %63 = vector.multi_reduction <add>, %62, %cst_28 [1] : vector<8x256xf32> to vector<8xf32>
    %64 = vector.shape_cast %63 : vector<8xf32> to vector<8x1xf32>
    %c0_29 = arith.constant 0 : index
    %c0_30 = arith.constant 0 : index
    %65 = memref.load %arg8[%c0_29, %c0_30] : memref<1x1xf32, #tpu.memory_space<smem>>
    %66 = vector.broadcast %65 : f32 to vector<8x1xf32>
    %67 = arith.addf %64, %66 : vector<8x1xf32>
    %c0_31 = arith.constant 0 : index
    %c0_32 = arith.constant 0 : index
    %68 = vector.load %arg9[%c0_31, %c0_32] : memref<8x1xf32, #tpu.memory_space<vmem>>, vector<8x1xf32>
    tpu.vector_store %arg9[%c0_31, %c0_32], %67 {strides = array<i32>} : memref<8x1xf32, #tpu.memory_space<vmem>>, vector<8x1xf32>,
    return
  }
}

</mosaic_0001>

<llo_original>
// kernel: tpu_custom_call.1
$region0: #{tpu_custom_call.1}
  #allocation0 [shape = 'u32[]', space=smem, size = 0x4, offset = 0x4, fixed_abs, tag = 'smem constant byte address 0x4 - core index']
  #allocation1 [shape = 'u32[144,128]{1,0:T(1,128)}', space=vmem, size = 0x12000, scoped, tag = 'internal scratch']
  #allocation2 [shape = 'f32[1,1]{1,0:T(1,128)S(6)}', space=smem, size = 0x200, scoped, tag = 'scoped memory for tpu_custom_call.1']
  %s0 = inlined_call_operand.hbm [shape: f32[8,128], index: 0, kind: input, shape index: {}]
  %s1 = inlined_call_operand.hbm [shape: bf16[128,1024], index: 1, kind: input, shape index: {}]
  %s2 = inlined_call_operand.hbm [shape: f32[1,1024], index: 2, kind: input, shape index: {}]
  %s3 = inlined_call_operand.hbm [shape: f32[1,1024], index: 3, kind: input, shape index: {}]
  %s4 = inlined_call_operand.hbm [shape: bf16[1024,256], index: 4, kind: input, shape index: {}]
  %s5 = inlined_call_operand.vmem [shape: f32[1,256], index: 5, kind: input, shape index: {}]
  %s6 = inlined_call_operand.vmem [shape: f32[1,256], index: 6, kind: input, shape index: {}]
  %s7 = inlined_call_operand.vmem [shape: bf16[1,256], index: 7, kind: input, shape index: {}]
  %s8 = inlined_call_operand.<no memory space> [shape: f32[1,1], index: 8, kind: input, shape index: {}]
  %s9 = inlined_call_operand.vmem [shape: f32[8,1], index: 9, kind: output, shape index: {}]
  %s10 = sld [smem:[#allocation0]]
  $region66: #{tpu_custom_call.1} parent=0
    _
  %s12 = ssub.s32 1, %s10
  %s13 = scalar_select 0, %s12, %s10
  %14 = sst [smem:[#allocation2]] %s8
  $region1: #{tpu_custom_call.1} parent=0
    #allocation3 [shape = 'u8[4096]{0}', space=vmem, size = 0x1000, scoped, tag = 'input window, operand 0, single buffered']
    #allocation4 [shape = 's32[1]{0}', space=sflag, size = 0x4, scoped, tag = 'scoped memory for tpu_custom_call.1']
    #allocation5 [shape = 'u8[262144]{0}', space=vmem, size = 0x40000, scoped, tag = 'input window, operand 1, single buffered']
    #allocation6 [shape = 's32[1]{0}', space=sflag, size = 0x4, scoped, tag = 'scoped memory for tpu_custom_call.1']
    #allocation7 [shape = 'u8[4096]{0}', space=vmem, size = 0x1000, scoped, tag = 'input window, operand 2, single buffered']
    #allocation8 [shape = 'u8[4096]{0}', space=vmem, size = 0x1000, scoped, tag = 'input window, operand 3, single buffered']
    #allocation9 [shape = 's32[1]{0}', space=sflag, size = 0x4, scoped, tag = 'scoped memory for tpu_custom_call.1']
    #allocation10 [shape = 'u8[524288]{0}', space=vmem, size = 0x80000, scoped, tag = 'input window, operand 4, single buffered']
    %15 = vsyncpa [#allocation4], 0
    %16 = vsyncpa [#allocation6], 0
    %17 = vsyncpa [#allocation9], 0
    // Predicated region
    $region2: #{tpu_custom_call.1} parent=1 // pred_check
      _
    $region3: #{tpu_custom_call.1} parent=1 // pred_check_branch
      %19 = sbr.rel (0) target = $region5
    $region4: #{tpu_custom_call.1} parent=1 // pred_region
      %s21 = ssub.s32 128, 128
      %22 = vsyncadd [#allocation4], %s21
      %s24 = sshll.u32 [#allocation3], 4
      %s25 = int_to_ptr.vmem [resolvable:$true] %s24
      %27 = dma.hbm_to_vmem [thread:$0]  %s0, 128, %s25, [#allocation4]
    $region5: #{tpu_custom_call.1} parent=1 // pred_fallthru
      _
    // Predicated region
    $region6: #{tpu_custom_call.1} parent=1 // pred_check
      _
    $region7: #{tpu_custom_call.1} parent=1 // pred_check_branch
      %29 = sbr.rel (0) target = $region9
    $region8: #{tpu_custom_call.1} parent=1 // pred_region
      %s31 = ssub.s32 8192, 8192
      %32 = vsyncadd [#allocation6], %s31
      %s33 = sshll.u32 [#allocation5], 4
      %s34 = int_to_ptr.vmem [resolvable:$true] %s33
      %39 = dma.hbm_to_vmem [thread:$0]  %s1, 8192, %s34, [#allocation6], 512, 512, 32
    $region9: #{tpu_custom_call.1} parent=1 // pred_fallthru
      _
    // Predicated region
    $region10: #{tpu_custom_call.1} parent=1 // pred_check
      _
    $region11: #{tpu_custom_call.1} parent=1 // pred_check_branch
      %41 = sbr.rel (0) target = $region13
    $region12: #{tpu_custom_call.1} parent=1 // pred_region
      %s43 = ssub.s32 128, 128
      %44 = vsyncadd [#allocation6], %s43
      %s46 = sshll.u32 [#allocation7], 4
      %s47 = int_to_ptr.vmem [resolvable:$true] %s46
      %49 = dma.hbm_to_vmem [thread:$0]  %s2, 128, %s47, [#allocation6]
    $region13: #{tpu_custom_call.1} parent=1 // pred_fallthru
      _
    // Predicated region
    $region14: #{tpu_custom_call.1} parent=1 // pred_check
      _
    $region15: #{tpu_custom_call.1} parent=1 // pred_check_branch
      %51 = sbr.rel (0) target = $region17
    $region16: #{tpu_custom_call.1} parent=1 // pred_region
      %s53 = ssub.s32 128, 128
      %54 = vsyncadd [#allocation9], %s53
      %s56 = sshll.u32 [#allocation8], 4
      %s57 = int_to_ptr.vmem [resolvable:$true] %s56
      %59 = dma.hbm_to_vmem [thread:$0]  %s3, 128, %s57, [#allocation9]
    $region17: #{tpu_custom_call.1} parent=1 // pred_fallthru
      _
    // Predicated region
    $region18: #{tpu_custom_call.1} parent=1 // pred_check
      _
    $region19: #{tpu_custom_call.1} parent=1 // pred_check_branch
      %61 = sbr.rel (0) target = $region21
    $region20: #{tpu_custom_call.1} parent=1 // pred_region
      %s63 = ssub.s32 16384, 16384
      %64 = vsyncadd [#allocation9], %s63
      %s65 = sshll.u32 [#allocation10], 4
      %s66 = int_to_ptr.vmem [resolvable:$true] %s65
      %71 = dma.hbm_to_vmem [thread:$0]  %s4, 16384, %s66, [#allocation9], 128, 128, 8
    $region21: #{tpu_custom_call.1} parent=1 // pred_fallthru
      _
    // Predicated region
    $region22: #{tpu_custom_call.1} parent=1 // pred_check
      _
    $region23: #{tpu_custom_call.1} parent=1 // pred_check_branch
      %73 = sbr.rel (0) target = $region25
    $region24: #{tpu_custom_call.1} parent=1 // pred_region
      _
    $region25: #{tpu_custom_call.1} parent=1 // pred_fallthru
      _
    // Predicated region
    $region26: #{tpu_custom_call.1} parent=1 // pred_check
      _
    $region27: #{tpu_custom_call.1} parent=1 // pred_check_branch
      %75 = sbr.rel (0) target = $region29
    $region28: #{tpu_custom_call.1} parent=1 // pred_region
      _
    $region29: #{tpu_custom_call.1} parent=1 // pred_fallthru
      _
    // Predicated region
    $region30: #{tpu_custom_call.1} parent=1 // pred_check
      _
    $region31: #{tpu_custom_call.1} parent=1 // pred_check_branch
      %77 = sbr.rel (0) target = $region33
    $region32: #{tpu_custom_call.1} parent=1 // pred_region
      _
    $region33: #{tpu_custom_call.1} parent=1 // pred_fallthru
      _
    // Predicated region
    $region34: #{tpu_custom_call.1} parent=1 // pred_check
      _
    $region35: #{tpu_custom_call.1} parent=1 // pred_check_branch
      %79 = sbr.rel (0) target = $region37
    $region36: #{tpu_custom_call.1} parent=1 // pred_region
      _
    $region37: #{tpu_custom_call.1} parent=1 // pred_fallthru
      _
    // Predicated region
    $region38: #{tpu_custom_call.1} parent=1 // pred_check
      _
    $region39: #{tpu_custom_call.1} parent=1 // pred_check_branch
      %81 = sbr.rel (0) target = $region41
    $region40: #{tpu_custom_call.1} parent=1 // pred_region
      %82 = dma.done [#allocation4], 128
    $region41: #{tpu_custom_call.1} parent=1 // pred_fallthru
      _
    // Predicated region
    $region42: #{tpu_custom_call.1} parent=1 // pred_check
      _
    $region43: #{tpu_custom_call.1} parent=1 // pred_check_branch
      %84 = sbr.rel (0) target = $region45
    $region44: #{tpu_custom_call.1} parent=1 // pred_region
      %85 = dma.done [#allocation6], 8192
    $region45: #{tpu_custom_call.1} parent=1 // pred_fallthru
      _
    // Predicated region
    $region46: #{tpu_custom_call.1} parent=1 // pred_check
      _
    $region47: #{tpu_custom_call.1} parent=1 // pred_check_branch
      %87 = sbr.rel (0) target = $region49
    $region48: #{tpu_custom_call.1} parent=1 // pred_region
      %88 = dma.done [#allocation6], 128
    $region49: #{tpu_custom_call.1} parent=1 // pred_fallthru
      _
    // Predicated region
    $region50: #{tpu_custom_call.1} parent=1 // pred_check
      _
    $region51: #{tpu_custom_call.1} parent=1 // pred_check_branch
      %90 = sbr.rel (0) target = $region53
    $region52: #{tpu_custom_call.1} parent=1 // pred_region
      %91 = dma.done [#allocation9], 128
    $region53: #{tpu_custom_call.1} parent=1 // pred_fallthru
      _
    // Predicated region
    $region54: #{tpu_custom_call.1} parent=1 // pred_check
      _
    $region55: #{tpu_custom_call.1} parent=1 // pred_check_branch
      %93 = sbr.rel (0) target = $region57
    $region56: #{tpu_custom_call.1} parent=1 // pred_region
      %94 = dma.done [#allocation9], 16384
    $region57: #{tpu_custom_call.1} parent=1 // pred_fallthru
      _
    %v96 = vld [vmem:[#allocation3] sm:$0xff]
    %v97 = vpack.c.bf16 %v96, %v96
    %v98 = vld [vmem:[#allocation5] sm:$0xff]
    %v99 = vld [vmem:[#allocation5 + $0x8] sm:$0xff]
    %v100 = vld [vmem:[#allocation5 + $0x10] sm:$0xff]
    %v101 = vld [vmem:[#allocation5 + $0x18] sm:$0xff]
    %v102 = vld [vmem:[#allocation5 + $0x20] sm:$0xff]
    %v103 = vld [vmem:[#allocation5 + $0x28] sm:$0xff]
    %v104 = vld [vmem:[#allocation5 + $0x30] sm:$0xff]
    %v105 = vld [vmem:[#allocation5 + $0x38] sm:$0xff]
    %v106 = vld [vmem:[#allocation5 + $0x40] sm:$0xff]
    %v107 = vld [vmem:[#allocation5 + $0x48] sm:$0xff]
    %v108 = vld [vmem:[#allocation5 + $0x50] sm:$0xff]
    %v109 = vld [vmem:[#allocation5 + $0x58] sm:$0xff]
    %v110 = vld [vmem:[#allocation5 + $0x60] sm:$0xff]
    %v111 = vld [vmem:[#allocation5 + $0x68] sm:$0xff]
    %v112 = vld [vmem:[#allocation5 + $0x70] sm:$0xff]
    %v113 = vld [vmem:[#allocation5 + $0x78] sm:$0xff]
    %v114 = vld [vmem:[#allocation5 + $0x80] sm:$0xff]
    %v115 = vld [vmem:[#allocation5 + $0x88] sm:$0xff]
    %v116 = vld [vmem:[#allocation5 + $0x90] sm:$0xff]
    %v117 = vld [vmem:[#allocation5 + $0x98] sm:$0xff]
    %v118 = vld [vmem:[#allocation5 + $0xa0] sm:$0xff]
    %v119 = vld [vmem:[#allocation5 + $0xa8] sm:$0xff]
    %v120 = vld [vmem:[#allocation5 + $0xb0] sm:$0xff]
    %v121 = vld [vmem:[#allocation5 + $0xb8] sm:$0xff]
    %v122 = vld [vmem:[#allocation5 + $0xc0] sm:$0xff]
    %v123 = vld [vmem:[#allocation5 + $0xc8] sm:$0xff]
    %v124 = vld [vmem:[#allocation5 + $0xd0] sm:$0xff]
    %v125 = vld [vmem:[#allocation5 + $0xd8] sm:$0xff]
    %v126 = vld [vmem:[#allocation5 + $0xe0] sm:$0xff]
    %v127 = vld [vmem:[#allocation5 + $0xe8] sm:$0xff]
    %v128 = vld [vmem:[#allocation5 + $0xf0] sm:$0xff]
    %v129 = vld [vmem:[#allocation5 + $0xf8] sm:$0xff]
    %v130 = vld [vmem:[#allocation5 + $0x100] sm:$0xff]
    %v131 = vld [vmem:[#allocation5 + $0x108] sm:$0xff]
    %v132 = vld [vmem:[#allocation5 + $0x110] sm:$0xff]
    %v133 = vld [vmem:[#allocation5 + $0x118] sm:$0xff]
    %v134 = vld [vmem:[#allocation5 + $0x120] sm:$0xff]
    %v135 = vld [vmem:[#allocation5 + $0x128] sm:$0xff]
    %v136 = vld [vmem:[#allocation5 + $0x130] sm:$0xff]
    %v137 = vld [vmem:[#allocation5 + $0x138] sm:$0xff]
    %v138 = vld [vmem:[#allocation5 + $0x140] sm:$0xff]
    %v139 = vld [vmem:[#allocation5 + $0x148] sm:$0xff]
    %v140 = vld [vmem:[#allocation5 + $0x150] sm:$0xff]
    %v141 = vld [vmem:[#allocation5 + $0x158] sm:$0xff]
    %v142 = vld [vmem:[#allocation5 + $0x160] sm:$0xff]
    %v143 = vld [vmem:[#allocation5 + $0x168] sm:$0xff]
    %v144 = vld [vmem:[#allocation5 + $0x170] sm:$0xff]
    %v145 = vld [vmem:[#allocation5 + $0x178] sm:$0xff]
    %v146 = vld [vmem:[#allocation5 + $0x180] sm:$0xff]
    %v147 = vld [vmem:[#allocation5 + $0x188] sm:$0xff]
    %v148 = vld [vmem:[#allocation5 + $0x190] sm:$0xff]
    %v149 = vld [vmem:[#allocation5 + $0x198] sm:$0xff]
    %v150 = vld [vmem:[#allocation5 + $0x1a0] sm:$0xff]
    %v151 = vld [vmem:[#allocation5 + $0x1a8] sm:$0xff]
    %v152 = vld [vmem:[#allocation5 + $0x1b0] sm:$0xff]
    %v153 = vld [vmem:[#allocation5 + $0x1b8] sm:$0xff]
    %v154 = vld [vmem:[#allocation5 + $0x1c0] sm:$0xff]
    %v155 = vld [vmem:[#allocation5 + $0x1c8] sm:$0xff]
    %v156 = vld [vmem:[#allocation5 + $0x1d0] sm:$0xff]
    %v157 = vld [vmem:[#allocation5 + $0x1d8] sm:$0xff]
    %v158 = vld [vmem:[#allocation5 + $0x1e0] sm:$0xff]
    %v159 = vld [vmem:[#allocation5 + $0x1e8] sm:$0xff]
    %v160 = vld [vmem:[#allocation5 + $0x1f0] sm:$0xff]
    %v161 = vld [vmem:[#allocation5 + $0x1f8] sm:$0xff]
    %v226 = vunpack.c.l.b16 %v98
    %v227 = vunpack.c.h.b16 %v98
    %v228 = vunpack.c.l.b16 %v99
    %v229 = vunpack.c.h.b16 %v99
    %v230 = vunpack.c.l.b16 %v100
    %v231 = vunpack.c.h.b16 %v100
    %v232 = vunpack.c.l.b16 %v101
    %v233 = vunpack.c.h.b16 %v101
    %v234 = vunpack.c.l.b16 %v102
    %v235 = vunpack.c.h.b16 %v102
    %v236 = vunpack.c.l.b16 %v103
    %v237 = vunpack.c.h.b16 %v103
    %v238 = vunpack.c.l.b16 %v104
    %v239 = vunpack.c.h.b16 %v104
    %v240 = vunpack.c.l.b16 %v105
    %v241 = vunpack.c.h.b16 %v105
    %v242 = vunpack.c.l.b16 %v106
    %v243 = vunpack.c.h.b16 %v106
    %v244 = vunpack.c.l.b16 %v107
    %v245 = vunpack.c.h.b16 %v107
    %v246 = vunpack.c.l.b16 %v108
    %v247 = vunpack.c.h.b16 %v108
    %v248 = vunpack.c.l.b16 %v109
    %v249 = vunpack.c.h.b16 %v109
    %v250 = vunpack.c.l.b16 %v110
    %v251 = vunpack.c.h.b16 %v110
    %v252 = vunpack.c.l.b16 %v111
    %v253 = vunpack.c.h.b16 %v111
    %v254 = vunpack.c.l.b16 %v112
    %v255 = vunpack.c.h.b16 %v112
    %v256 = vunpack.c.l.b16 %v113
    %v257 = vunpack.c.h.b16 %v113
    %v258 = vunpack.c.l.b16 %v114
    %v259 = vunpack.c.h.b16 %v114
    %v260 = vunpack.c.l.b16 %v115
    %v261 = vunpack.c.h.b16 %v115
    %v262 = vunpack.c.l.b16 %v116
    %v263 = vunpack.c.h.b16 %v116
    %v264 = vunpack.c.l.b16 %v117
    %v265 = vunpack.c.h.b16 %v117
    %v266 = vunpack.c.l.b16 %v118
    %v267 = vunpack.c.h.b16 %v118
    %v268 = vunpack.c.l.b16 %v119
    %v269 = vunpack.c.h.b16 %v119
    %v270 = vunpack.c.l.b16 %v120
    %v271 = vunpack.c.h.b16 %v120
    %v272 = vunpack.c.l.b16 %v121
    %v273 = vunpack.c.h.b16 %v121
    %v274 = vunpack.c.l.b16 %v122
    %v275 = vunpack.c.h.b16 %v122
    %v276 = vunpack.c.l.b16 %v123
    %v277 = vunpack.c.h.b16 %v123
    %v278 = vunpack.c.l.b16 %v124
    %v279 = vunpack.c.h.b16 %v124
    %v280 = vunpack.c.l.b16 %v125
    %v281 = vunpack.c.h.b16 %v125
    %v282 = vunpack.c.l.b16 %v126
    %v283 = vunpack.c.h.b16 %v126
    %v284 = vunpack.c.l.b16 %v127
    %v285 = vunpack.c.h.b16 %v127
    %v286 = vunpack.c.l.b16 %v128
    %v287 = vunpack.c.h.b16 %v128
    %v288 = vunpack.c.l.b16 %v129
    %v289 = vunpack.c.h.b16 %v129
    %v290 = vunpack.c.l.b16 %v130
    %v291 = vunpack.c.h.b16 %v130
    %v292 = vunpack.c.l.b16 %v131
    %v293 = vunpack.c.h.b16 %v131
    %v294 = vunpack.c.l.b16 %v132
    %v295 = vunpack.c.h.b16 %v132
    %v296 = vunpack.c.l.b16 %v133
    %v297 = vunpack.c.h.b16 %v133
    %v298 = vunpack.c.l.b16 %v134
    %v299 = vunpack.c.h.b16 %v134
    %v300 = vunpack.c.l.b16 %v135
    %v301 = vunpack.c.h.b16 %v135
    %v302 = vunpack.c.l.b16 %v136
    %v303 = vunpack.c.h.b16 %v136
    %v304 = vunpack.c.l.b16 %v137
    %v305 = vunpack.c.h.b16 %v137
    %v306 = vunpack.c.l.b16 %v138
    %v307 = vunpack.c.h.b16 %v138
    %v308 = vunpack.c.l.b16 %v139
    %v309 = vunpack.c.h.b16 %v139
    %v310 = vunpack.c.l.b16 %v140
    %v311 = vunpack.c.h.b16 %v140
    %v312 = vunpack.c.l.b16 %v141
    %v313 = vunpack.c.h.b16 %v141
    %v314 = vunpack.c.l.b16 %v142
    %v315 = vunpack.c.h.b16 %v142
    %v316 = vunpack.c.l.b16 %v143
    %v317 = vunpack.c.h.b16 %v143
    %v318 = vunpack.c.l.b16 %v144
    %v319 = vunpack.c.h.b16 %v144
    %v320 = vunpack.c.l.b16 %v145
    %v321 = vunpack.c.h.b16 %v145
    %v322 = vunpack.c.l.b16 %v146
    %v323 = vunpack.c.h.b16 %v146
    %v324 = vunpack.c.l.b16 %v147
    %v325 = vunpack.c.h.b16 %v147
    %v326 = vunpack.c.l.b16 %v148
    %v327 = vunpack.c.h.b16 %v148
    %v328 = vunpack.c.l.b16 %v149
    %v329 = vunpack.c.h.b16 %v149
    %v330 = vunpack.c.l.b16 %v150
    %v331 = vunpack.c.h.b16 %v150
    %v332 = vunpack.c.l.b16 %v151
    %v333 = vunpack.c.h.b16 %v151
    %v334 = vunpack.c.l.b16 %v152
    %v335 = vunpack.c.h.b16 %v152
    %v336 = vunpack.c.l.b16 %v153
    %v337 = vunpack.c.h.b16 %v153
    %v338 = vunpack.c.l.b16 %v154
    %v339 = vunpack.c.h.b16 %v154
    %v340 = vunpack.c.l.b16 %v155
    %v341 = vunpack.c.h.b16 %v155
    %v342 = vunpack.c.l.b16 %v156
    %v343 = vunpack.c.h.b16 %v156
    %v344 = vunpack.c.l.b16 %v157
    %v345 = vunpack.c.h.b16 %v157
    %v346 = vunpack.c.l.b16 %v158
    %v347 = vunpack.c.h.b16 %v158
    %v348 = vunpack.c.l.b16 %v159
    %v349 = vunpack.c.h.b16 %v159
    %v350 = vunpack.c.l.b16 %v160
    %v351 = vunpack.c.h.b16 %v160
    %v352 = vunpack.c.l.b16 %v161
    %v353 = vunpack.c.h.b16 %v161
    %v354 = vpack.c.b16 %v234, %v226
    %v355 = vpack.c.b16 %v235, %v227
    %v356 = vpack.c.b16 %v236, %v228
    %v357 = vpack.c.b16 %v237, %v229
    %v358 = vpack.c.b16 %v238, %v230
    %v359 = vpack.c.b16 %v239, %v231
    %v360 = vpack.c.b16 %v240, %v232
    %v361 = vpack.c.b16 %v241, %v233
    %v362 = vpack.c.b16 %v250, %v242
    %v363 = vpack.c.b16 %v251, %v243
    %v364 = vpack.c.b16 %v252, %v244
    %v365 = vpack.c.b16 %v253, %v245
    %v366 = vpack.c.b16 %v254, %v246
    %v367 = vpack.c.b16 %v255, %v247
    %v368 = vpack.c.b16 %v256, %v248
    %v369 = vpack.c.b16 %v257, %v249
    %v370 = vpack.c.b16 %v266, %v258
    %v371 = vpack.c.b16 %v267, %v259
    %v372 = vpack.c.b16 %v268, %v260
    %v373 = vpack.c.b16 %v269, %v261
    %v374 = vpack.c.b16 %v270, %v262
    %v375 = vpack.c.b16 %v271, %v263
    %v376 = vpack.c.b16 %v272, %v264
    %v377 = vpack.c.b16 %v273, %v265
    %v378 = vpack.c.b16 %v282, %v274
    %v379 = vpack.c.b16 %v283, %v275
    %v380 = vpack.c.b16 %v284, %v276
    %v381 = vpack.c.b16 %v285, %v277
    %v382 = vpack.c.b16 %v286, %v278
    %v383 = vpack.c.b16 %v287, %v279
    %v384 = vpack.c.b16 %v288, %v280
    %v385 = vpack.c.b16 %v289, %v281
    %v386 = vpack.c.b16 %v298, %v290
    %v387 = vpack.c.b16 %v299, %v291
    %v388 = vpack.c.b16 %v300, %v292
    %v389 = vpack.c.b16 %v301, %v293
    %v390 = vpack.c.b16 %v302, %v294
    %v391 = vpack.c.b16 %v303, %v295
    %v392 = vpack.c.b16 %v304, %v296
    %v393 = vpack.c.b16 %v305, %v297
    %v394 = vpack.c.b16 %v314, %v306
    %v395 = vpack.c.b16 %v315, %v307
    %v396 = vpack.c.b16 %v316, %v308
    %v397 = vpack.c.b16 %v317, %v309
    %v398 = vpack.c.b16 %v318, %v310
    %v399 = vpack.c.b16 %v319, %v311
    %v400 = vpack.c.b16 %v320, %v312
    %v401 = vpack.c.b16 %v321, %v313
    %v402 = vpack.c.b16 %v330, %v322
    %v403 = vpack.c.b16 %v331, %v323
    %v404 = vpack.c.b16 %v332, %v324
    %v405 = vpack.c.b16 %v333, %v325
    %v406 = vpack.c.b16 %v334, %v326
    %v407 = vpack.c.b16 %v335, %v327
    %v408 = vpack.c.b16 %v336, %v328
    %v409 = vpack.c.b16 %v337, %v329
    %v410 = vpack.c.b16 %v346, %v338
    %v411 = vpack.c.b16 %v347, %v339
    %v412 = vpack.c.b16 %v348, %v340
    %v413 = vpack.c.b16 %v349, %v341
    %v414 = vpack.c.b16 %v350, %v342
    %v415 = vpack.c.b16 %v351, %v343
    %v416 = vpack.c.b16 %v352, %v344
    %v417 = vpack.c.b16 %v353, %v345
    %482 = vmatprep.subr.bf16.mxu0 %v411
    %483 = vmatpush1.bf16.msra.mxu0 %v410
    %484 = vmatprep.subr.bf16.mxu0 %v403
    %485 = vmatpush1.bf16.msra.mxu0 %v402
    %486 = vmatprep.subr.bf16.mxu0 %v395
    %487 = vmatpush1.bf16.msra.mxu0 %v394
    %488 = vmatprep.subr.bf16.mxu0 %v387
    %489 = vmatpush1.bf16.msra.mxu0 %v386
    %490 = vmatprep.subr.bf16.mxu0 %v379
    %491 = vmatpush1.bf16.msra.mxu0 %v378
    %492 = vmatprep.subr.bf16.mxu0 %v371
    %493 = vmatpush1.bf16.msra.mxu0 %v370
    %494 = vmatprep.subr.bf16.mxu0 %v363
    %495 = vmatpush1.bf16.msra.mxu0 %v362
    %496 = vmatprep.subr.bf16.mxu0 %v355
    %497 = vmatpush1.bf16.msra.mxu0 %v354
    %498 = vmatprep.subr.bf16.mxu0 0
    %499 = vmatpush2.bf16.msra.mxu0 0
    %500 = vmatprep.subr.bf16.mxu0 0
    %501 = vmatpush2.bf16.msra.mxu0 0
    %502 = vmatprep.subr.bf16.mxu0 0
    %503 = vmatpush2.bf16.msra.mxu0 0
    %504 = vmatprep.subr.bf16.mxu0 0
    %505 = vmatpush2.bf16.msra.mxu0 0
    %506 = vmatprep.subr.bf16.mxu0 0
    %507 = vmatpush2.bf16.msra.mxu0 0
    %508 = vmatprep.subr.bf16.mxu0 0
    %509 = vmatpush2.bf16.msra.mxu0 0
    %510 = vmatprep.subr.bf16.mxu0 0
    %511 = vmatpush2.bf16.msra.mxu0 0
    %512 = vmatprep.subr.bf16.mxu0 0
    %513 = vmatpush2.bf16.msra.mxu0 0
    %514 = vmatprep.mubr.bf16.mxu0 0
    %515 = vmatmul.mubr.bf16.gmra.mxu0 %v97
    %v516 = vpop.f32.mrf.mxu0
    %v517 = vadd.f32 0.0, %v516
    %v518 = vpop.f32.mrf.mxu0
    %v519 = vadd.f32 0.0, %v518
    %v520 = vpop.f32.mrf.mxu0
    %v521 = vpop.f32.mrf.mxu0
    %522 = vdwg.mxu0
    %523 = vmatprep.subr.bf16.mxu0 %v413
    %524 = vmatpush1.bf16.msra.mxu0 %v412
    %525 = vmatprep.subr.bf16.mxu0 %v405
    %526 = vmatpush1.bf16.msra.mxu0 %v404
    %527 = vmatprep.subr.bf16.mxu0 %v397
    %528 = vmatpush1.bf16.msra.mxu0 %v396
    %529 = vmatprep.subr.bf16.mxu0 %v389
    %530 = vmatpush1.bf16.msra.mxu0 %v388
    %531 = vmatprep.subr.bf16.mxu0 %v381
    %532 = vmatpush1.bf16.msra.mxu0 %v380
    %533 = vmatprep.subr.bf16.mxu0 %v373
    %534 = vmatpush1.bf16.msra.mxu0 %v372
    %535 = vmatprep.subr.bf16.mxu0 %v365
    %536 = vmatpush1.bf16.msra.mxu0 %v364
    %537 = vmatprep.subr.bf16.mxu0 %v357
    %538 = vmatpush1.bf16.msra.mxu0 %v356
    %539 = vmatprep.subr.bf16.mxu0 0
    %540 = vmatpush2.bf16.msra.mxu0 0
    %541 = vmatprep.subr.bf16.mxu0 0
    %542 = vmatpush2.bf16.msra.mxu0 0
    %543 = vmatprep.subr.bf16.mxu0 0
    %544 = vmatpush2.bf16.msra.mxu0 0
    %545 = vmatprep.subr.bf16.mxu0 0
    %546 = vmatpush2.bf16.msra.mxu0 0
    %547 = vmatprep.subr.bf16.mxu0 0
    %548 = vmatpush2.bf16.msra.mxu0 0
    %549 = vmatprep.subr.bf16.mxu0 0
    %550 = vmatpush2.bf16.msra.mxu0 0
    %551 = vmatprep.subr.bf16.mxu0 0
    %552 = vmatpush2.bf16.msra.mxu0 0
    %553 = vmatprep.subr.bf16.mxu0 0
    %554 = vmatpush2.bf16.msra.mxu0 0
    %555 = vmatprep.mubr.bf16.mxu0 0
    %556 = vmatmul.mubr.bf16.gmra.mxu0 %v97
    %v557 = vpop.f32.mrf.mxu0
    %v558 = vadd.f32 0.0, %v557
    %v559 = vpop.f32.mrf.mxu0
    %v560 = vadd.f32 0.0, %v559
    %v561 = vpop.f32.mrf.mxu0
    %v562 = vpop.f32.mrf.mxu0
    %563 = vdwg.mxu0
    %564 = vmatprep.subr.bf16.mxu0 %v415
    %565 = vmatpush1.bf16.msra.mxu0 %v414
    %566 = vmatprep.subr.bf16.mxu0 %v407
    %567 = vmatpush1.bf16.msra.mxu0 %v406
    %568 = vmatprep.subr.bf16.mxu0 %v399
    %569 = vmatpush1.bf16.msra.mxu0 %v398
    %570 = vmatprep.subr.bf16.mxu0 %v391
    %571 = vmatpush1.bf16.msra.mxu0 %v390
    %572 = vmatprep.subr.bf16.mxu0 %v383
    %573 = vmatpush1.bf16.msra.mxu0 %v382
    %574 = vmatprep.subr.bf16.mxu0 %v375
    %575 = vmatpush1.bf16.msra.mxu0 %v374
    %576 = vmatprep.subr.bf16.mxu0 %v367
    %577 = vmatpush1.bf16.msra.mxu0 %v366
    %578 = vmatprep.subr.bf16.mxu0 %v359
    %579 = vmatpush1.bf16.msra.mxu0 %v358
    %580 = vmatprep.subr.bf16.mxu0 0
    %581 = vmatpush2.bf16.msra.mxu0 0
    %582 = vmatprep.subr.bf16.mxu0 0
    %583 = vmatpush2.bf16.msra.mxu0 0
    %584 = vmatprep.subr.bf16.mxu0 0
    %585 = vmatpush2.bf16.msra.mxu0 0
    %586 = vmatprep.subr.bf16.mxu0 0
    %587 = vmatpush2.bf16.msra.mxu0 0
    %588 = vmatprep.subr.bf16.mxu0 0
    %589 = vmatpush2.bf16.msra.mxu0 0
    %590 = vmatprep.subr.bf16.mxu0 0
    %591 = vmatpush2.bf16.msra.mxu0 0
    %592 = vmatprep.subr.bf16.mxu0 0
    %593 = vmatpush2.bf16.msra.mxu0 0
    %594 = vmatprep.subr.bf16.mxu0 0
    %595 = vmatpush2.bf16.msra.mxu0 0
    %596 = vmatprep.mubr.bf16.mxu0 0
    %597 = vmatmul.mubr.bf16.gmra.mxu0 %v97
    %v598 = vpop.f32.mrf.mxu0
    %v599 = vadd.f32 0.0, %v598
    %v600 = vpop.f32.mrf.mxu0
    %v601 = vadd.f32 0.0, %v600
    %v602 = vpop.f32.mrf.mxu0
    %v603 = vpop.f32.mrf.mxu0
    %604 = vdwg.mxu0
    %605 = vmatprep.subr.bf16.mxu0 %v417
    %606 = vmatpush1.bf16.msra.mxu0 %v416
    %607 = vmatprep.subr.bf16.mxu0 %v409
    %608 = vmatpush1.bf16.msra.mxu0 %v408
    %609 = vmatprep.subr.bf16.mxu0 %v401
    %610 = vmatpush1.bf16.msra.mxu0 %v400
    %611 = vmatprep.subr.bf16.mxu0 %v393
    %612 = vmatpush1.bf16.msra.mxu0 %v392
    %613 = vmatprep.subr.bf16.mxu0 %v385
    %614 = vmatpush1.bf16.msra.mxu0 %v384
    %615 = vmatprep.subr.bf16.mxu0 %v377
    %616 = vmatpush1.bf16.msra.mxu0 %v376
    %617 = vmatprep.subr.bf16.mxu0 %v369
    %618 = vmatpush1.bf16.msra.mxu0 %v368
    %619 = vmatprep.subr.bf16.mxu0 %v361
    %620 = vmatpush1.bf16.msra.mxu0 %v360
    %621 = vmatprep.subr.bf16.mxu0 0
    %622 = vmatpush2.bf16.msra.mxu0 0
    %623 = vmatprep.subr.bf16.mxu0 0
    %624 = vmatpush2.bf16.msra.mxu0 0
    %625 = vmatprep.subr.bf16.mxu0 0
    %626 = vmatpush2.bf16.msra.mxu0 0
    %627 = vmatprep.subr.bf16.mxu0 0
    %628 = vmatpush2.bf16.msra.mxu0 0
    %629 = vmatprep.subr.bf16.mxu0 0
    %630 = vmatpush2.bf16.msra.mxu0 0
    %631 = vmatprep.subr.bf16.mxu0 0
    %632 = vmatpush2.bf16.msra.mxu0 0
    %633 = vmatprep.subr.bf16.mxu0 0
    %634 = vmatpush2.bf16.msra.mxu0 0
    %635 = vmatprep.subr.bf16.mxu0 0
    %636 = vmatpush2.bf16.msra.mxu0 0
    %637 = vmatprep.mubr.bf16.mxu0 0
    %638 = vmatmul.mubr.bf16.gmra.mxu0 %v97
    %v639 = vpop.f32.mrf.mxu0
    %v640 = vadd.f32 0.0, %v639
    %v641 = vpop.f32.mrf.mxu0
    %v642 = vadd.f32 0.0, %v641
    %v643 = vpop.f32.mrf.mxu0
    %v644 = vpop.f32.mrf.mxu0
    %645 = vdwg.mxu0
    %v646 = vrot.slane %v517, 4
    %v647 = vadd.f32 %v517, %v646
    %v648 = vrot.slane %v647, 2
    %v649 = vadd.f32 %v647, %v648
    %v650 = vrot.slane %v649, 1
    %v651 = vadd.f32 %v649, %v650
    %v652 = vrot.slane %v519, 4
    %v653 = vadd.f32 %v519, %v652
    %v654 = vrot.slane %v653, 2
    %v655 = vadd.f32 %v653, %v654
    %v656 = vrot.slane %v655, 1
    %v657 = vadd.f32 %v655, %v656
    %v658 = vrot.slane %v558, 4
    %v659 = vadd.f32 %v558, %v658
    %v660 = vrot.slane %v659, 2
    %v661 = vadd.f32 %v659, %v660
    %v662 = vrot.slane %v661, 1
    %v663 = vadd.f32 %v661, %v662
    %v664 = vrot.slane %v560, 4
    %v665 = vadd.f32 %v560, %v664
    %v666 = vrot.slane %v665, 2
    %v667 = vadd.f32 %v665, %v666
    %v668 = vrot.slane %v667, 1
    %v669 = vadd.f32 %v667, %v668
    %v670 = vrot.slane %v599, 4
    %v671 = vadd.f32 %v599, %v670
    %v672 = vrot.slane %v671, 2
    %v673 = vadd.f32 %v671, %v672
    %v674 = vrot.slane %v673, 1
    %v675 = vadd.f32 %v673, %v674
    %v676 = vrot.slane %v601, 4
    %v677 = vadd.f32 %v601, %v676
    %v678 = vrot.slane %v677, 2
    %v679 = vadd.f32 %v677, %v678
    %v680 = vrot.slane %v679, 1
    %v681 = vadd.f32 %v679, %v680
    %v682 = vrot.slane %v640, 4
    %v683 = vadd.f32 %v640, %v682
    %v684 = vrot.slane %v683, 2
    %v685 = vadd.f32 %v683, %v684
    %v686 = vrot.slane %v685, 1
    %v687 = vadd.f32 %v685, %v686
    %v688 = vrot.slane %v642, 4
    %v689 = vadd.f32 %v642, %v688
    %v690 = vrot.slane %v689, 2
    %v691 = vadd.f32 %v689, %v690
    %v692 = vrot.slane %v691, 1
    %v693 = vadd.f32 %v691, %v692
    %v694 = vmul.f32 %v651, 0.125
    %v695 = vmul.f32 %v657, 0.125
    %v696 = vmul.f32 %v663, 0.125
    %v697 = vmul.f32 %v669, 0.125
    %v698 = vmul.f32 %v675, 0.125
    %v699 = vmul.f32 %v681, 0.125
    %v700 = vmul.f32 %v687, 0.125
    %v701 = vmul.f32 %v693, 0.125
    %v702 = vsub.f32 %v517, %v694
    %v703 = vsub.f32 %v519, %v695
    %v704 = vsub.f32 %v558, %v696
    %v705 = vsub.f32 %v560, %v697
    %v706 = vsub.f32 %v599, %v698
    %v707 = vsub.f32 %v601, %v699
    %v708 = vsub.f32 %v640, %v700
    %v709 = vsub.f32 %v642, %v701
    %v710 = vmul.f32 %v702, %v702
    %v711 = vmul.f32 %v703, %v703
    %v712 = vmul.f32 %v704, %v704
    %v713 = vmul.f32 %v705, %v705
    %v714 = vmul.f32 %v706, %v706
    %v715 = vmul.f32 %v707, %v707
    %v716 = vmul.f32 %v708, %v708
    %v717 = vmul.f32 %v709, %v709
    %v718 = vrot.slane %v710, 4
    %v719 = vadd.f32 %v710, %v718
    %v720 = vrot.slane %v719, 2
    %v721 = vadd.f32 %v719, %v720
    %v722 = vrot.slane %v721, 1
    %v723 = vadd.f32 %v721, %v722
    %v724 = vrot.slane %v711, 4
    %v725 = vadd.f32 %v711, %v724
    %v726 = vrot.slane %v725, 2
    %v727 = vadd.f32 %v725, %v726
    %v728 = vrot.slane %v727, 1
    %v729 = vadd.f32 %v727, %v728
    %v730 = vrot.slane %v712, 4
    %v731 = vadd.f32 %v712, %v730
    %v732 = vrot.slane %v731, 2
    %v733 = vadd.f32 %v731, %v732
    %v734 = vrot.slane %v733, 1
    %v735 = vadd.f32 %v733, %v734
    %v736 = vrot.slane %v713, 4
    %v737 = vadd.f32 %v713, %v736
    %v738 = vrot.slane %v737, 2
    %v739 = vadd.f32 %v737, %v738
    %v740 = vrot.slane %v739, 1
    %v741 = vadd.f32 %v739, %v740
    %v742 = vrot.slane %v714, 4
    %v743 = vadd.f32 %v714, %v742
    %v744 = vrot.slane %v743, 2
    %v745 = vadd.f32 %v743, %v744
    %v746 = vrot.slane %v745, 1
    %v747 = vadd.f32 %v745, %v746
    %v748 = vrot.slane %v715, 4
    %v749 = vadd.f32 %v715, %v748
    %v750 = vrot.slane %v749, 2
    %v751 = vadd.f32 %v749, %v750
    %v752 = vrot.slane %v751, 1
    %v753 = vadd.f32 %v751, %v752
    %v754 = vrot.slane %v716, 4
    %v755 = vadd.f32 %v716, %v754
    %v756 = vrot.slane %v755, 2
    %v757 = vadd.f32 %v755, %v756
    %v758 = vrot.slane %v757, 1
    %v759 = vadd.f32 %v757, %v758
    %v760 = vrot.slane %v717, 4
    %v761 = vadd.f32 %v717, %v760
    %v762 = vrot.slane %v761, 2
    %v763 = vadd.f32 %v761, %v762
    %v764 = vrot.slane %v763, 1
    %v765 = vadd.f32 %v763, %v764
    %v766 = vmul.f32 %v723, 0.125
    %v767 = vmul.f32 %v729, 0.125
    %v768 = vmul.f32 %v735, 0.125
    %v769 = vmul.f32 %v741, 0.125
    %v770 = vmul.f32 %v747, 0.125
    %v771 = vmul.f32 %v753, 0.125
    %v772 = vmul.f32 %v759, 0.125
    %v773 = vmul.f32 %v765, 0.125
    %v774 = vld [vmem:[#allocation7] sm:$0xff]
    %v775 = vld [vmem:[#allocation8] sm:$0xff]
    %v776 = vadd.f32 %v766, 1e-05
    %v777 = vadd.f32 %v767, 1e-05
    %v778 = vadd.f32 %v768, 1e-05
    %v779 = vadd.f32 %v769, 1e-05
    %v780 = vadd.f32 %v770, 1e-05
    %v781 = vadd.f32 %v771, 1e-05
    %v782 = vadd.f32 %v772, 1e-05
    %v783 = vadd.f32 %v773, 1e-05
    %v784 = vrsqrt.pop %v776
    %v785 = vrsqrt.pop %v777
    %v786 = vrsqrt.pop %v778
    %v787 = vrsqrt.pop %v779
    %v788 = vrsqrt.pop %v780
    %v789 = vrsqrt.pop %v781
    %v790 = vrsqrt.pop %v782
    %v791 = vrsqrt.pop %v783
    %v792 = vmul.f32 %v702, %v784
    %v793 = vmul.f32 %v703, %v785
    %v794 = vmul.f32 %v704, %v786
    %v795 = vmul.f32 %v705, %v787
    %v796 = vmul.f32 %v706, %v788
    %v797 = vmul.f32 %v707, %v789
    %v798 = vmul.f32 %v708, %v790
    %v799 = vmul.f32 %v709, %v791
    %v801 = vlaneseq
    %v802 = vshrl.u32 %v801, 7
    %v803 = vsub.s32 0, %v802
    %v804 = vrot.slane %v774, %v803
    %v805 = vlaneseq
    %v806 = vshrl.u32 %v805, 7
    %v807 = vsub.s32 1, %v806
    %v808 = vrot.slane %v774, %v807
    %v809 = vlaneseq
    %v810 = vshrl.u32 %v809, 7
    %v811 = vsub.s32 2, %v810
    %v812 = vrot.slane %v774, %v811
    %v813 = vlaneseq
    %v814 = vshrl.u32 %v813, 7
    %v815 = vsub.s32 3, %v814
    %v816 = vrot.slane %v774, %v815
    %v817 = vlaneseq
    %v818 = vshrl.u32 %v817, 7
    %v819 = vsub.s32 4, %v818
    %v820 = vrot.slane %v774, %v819
    %v821 = vlaneseq
    %v822 = vshrl.u32 %v821, 7
    %v823 = vsub.s32 5, %v822
    %v824 = vrot.slane %v774, %v823
    %v825 = vlaneseq
    %v826 = vshrl.u32 %v825, 7
    %v827 = vsub.s32 6, %v826
    %v828 = vrot.slane %v774, %v827
    %v829 = vlaneseq
    %v830 = vshrl.u32 %v829, 7
    %v831 = vsub.s32 7, %v830
    %v832 = vrot.slane %v774, %v831
    %v841 = vmul.f32 %v792, %v804
    %v842 = vmul.f32 %v793, %v808
    %v843 = vmul.f32 %v794, %v812
    %v844 = vmul.f32 %v795, %v816
    %v845 = vmul.f32 %v796, %v820
    %v846 = vmul.f32 %v797, %v824
    %v847 = vmul.f32 %v798, %v828
    %v848 = vmul.f32 %v799, %v832
    %v850 = vlaneseq
    %v851 = vshrl.u32 %v850, 7
    %v852 = vsub.s32 0, %v851
    %v853 = vrot.slane %v775, %v852
    %v854 = vlaneseq
    %v855 = vshrl.u32 %v854, 7
    %v856 = vsub.s32 1, %v855
    %v857 = vrot.slane %v775, %v856
    %v858 = vlaneseq
    %v859 = vshrl.u32 %v858, 7
    %v860 = vsub.s32 2, %v859
    %v861 = vrot.slane %v775, %v860
    %v862 = vlaneseq
    %v863 = vshrl.u32 %v862, 7
    %v864 = vsub.s32 3, %v863
    %v865 = vrot.slane %v775, %v864
    %v866 = vlaneseq
    %v867 = vshrl.u32 %v866, 7
    %v868 = vsub.s32 4, %v867
    %v869 = vrot.slane %v775, %v868
    %v870 = vlaneseq
    %v871 = vshrl.u32 %v870, 7
    %v872 = vsub.s32 5, %v871
    %v873 = vrot.slane %v775, %v872
    %v874 = vlaneseq
    %v875 = vshrl.u32 %v874, 7
    %v876 = vsub.s32 6, %v875
    %v877 = vrot.slane %v775, %v876
    %v878 = vlaneseq
    %v879 = vshrl.u32 %v878, 7
    %v880 = vsub.s32 7, %v879
    %v881 = vrot.slane %v775, %v880
    %v890 = vadd.f32 %v841, %v853
    %v891 = vadd.f32 %v842, %v857
    %v892 = vadd.f32 %v843, %v861
    %v893 = vadd.f32 %v844, %v865
    %v894 = vadd.f32 %v845, %v869
    %v895 = vadd.f32 %v846, %v873
    %v896 = vadd.f32 %v847, %v877
    %v897 = vadd.f32 %v848, %v881
    %v898 = vmax.f32 %v890, 0.0
    %v899 = vmax.f32 %v891, 0.0
    %v900 = vmax.f32 %v892, 0.0
    %v901 = vmax.f32 %v893, 0.0
    %v902 = vmax.f32 %v894, 0.0
    %v903 = vmax.f32 %v895, 0.0
    %v904 = vmax.f32 %v896, 0.0
    %v905 = vmax.f32 %v897, 0.0
    %v906 = vpack.c.bf16 %v898, %v898
    %v907 = vpack.c.bf16 %v899, %v899
    %v908 = vpack.c.bf16 %v900, %v900
    %v909 = vpack.c.bf16 %v901, %v901
    %v910 = vpack.c.bf16 %v902, %v902
    %v911 = vpack.c.bf16 %v903, %v903
    %v912 = vpack.c.bf16 %v904, %v904
    %v913 = vpack.c.bf16 %v905, %v905
    %v914 = vld [vmem:[#allocation10] sm:$0xff]
    %v915 = vld [vmem:[#allocation10 + $0x8] sm:$0xff]
    %v916 = vld [vmem:[#allocation10 + $0x10] sm:$0xff]
    %v917 = vld [vmem:[#allocation10 + $0x18] sm:$0xff]
    %v918 = vld [vmem:[#allocation10 + $0x20] sm:$0xff]
    %v919 = vld [vmem:[#allocation10 + $0x28] sm:$0xff]
    %v920 = vld [vmem:[#allocation10 + $0x30] sm:$0xff]
    %v921 = vld [vmem:[#allocation10 + $0x38] sm:$0xff]
    %v922 = vld [vmem:[#allocation10 + $0x40] sm:$0xff]
    %v923 = vld [vmem:[#allocation10 + $0x48] sm:$0xff]
    %v924 = vld [vmem:[#allocation10 + $0x50] sm:$0xff]
    %v925 = vld [vmem:[#allocation10 + $0x58] sm:$0xff]
    %v926 = vld [vmem:[#allocation10 + $0x60] sm:$0xff]
    %v927 = vld [vmem:[#allocation10 + $0x68] sm:$0xff]
    %v928 = vld [vmem:[#allocation10 + $0x70] sm:$0xff]
    %v929 = vld [vmem:[#allocation10 + $0x78] sm:$0xff]
    %v930 = vld [vmem:[#allocation10 + $0x80] sm:$0xff]
    %v931 = vld [vmem:[#allocation10 + $0x88] sm:$0xff]
    %v932 = vld [vmem:[#allocation10 + $0x90] sm:$0xff]
    %v933 = vld [vmem:[#allocation10 + $0x98] sm:$0xff]
    %v934 = vld [vmem:[#allocation10 + $0xa0] sm:$0xff]
    %v935 = vld [vmem:[#allocation10 + $0xa8] sm:$0xff]
    %v936 = vld [vmem:[#allocation10 + $0xb0] sm:$0xff]
    %v937 = vld [vmem:[#allocation10 + $0xb8] sm:$0xff]
    %v938 = vld [vmem:[#allocation10 + $0xc0] sm:$0xff]
    %v939 = vld [vmem:[#allocation10 + $0xc8] sm:$0xff]
    %v940 = vld [vmem:[#allocation10 + $0xd0] sm:$0xff]
    %v941 = vld [vmem:[#allocation10 + $0xd8] sm:$0xff]
    %v942 = vld [vmem:[#allocation10 + $0xe0] sm:$0xff]
    %v943 = vld [vmem:[#allocation10 + $0xe8] sm:$0xff]
    %v944 = vld [vmem:[#allocation10 + $0xf0] sm:$0xff]
    %v945 = vld [vmem:[#allocation10 + $0xf8] sm:$0xff]
    %v946 = vld [vmem:[#allocation10 + $0x100] sm:$0xff]
    %v947 = vld [vmem:[#allocation10 + $0x108] sm:$0xff]
    %v948 = vld [vmem:[#allocation10 + $0x110] sm:$0xff]
    %v949 = vld [vmem:[#allocation10 + $0x118] sm:$0xff]
    %v950 = vld [vmem:[#allocation10 + $0x120] sm:$0xff]
    %v951 = vld [vmem:[#allocation10 + $0x128] sm:$0xff]
    %v952 = vld [vmem:[#allocation10 + $0x130] sm:$0xff]
    %v953 = vld [vmem:[#allocation10 + $0x138] sm:$0xff]
    %v954 = vld [vmem:[#allocation10 + $0x140] sm:$0xff]
    %v955 = vld [vmem:[#allocation10 + $0x148] sm:$0xff]
    %v956 = vld [vmem:[#allocation10 + $0x150] sm:$0xff]
    %v957 = vld [vmem:[#allocation10 + $0x158] sm:$0xff]
    %v958 = vld [vmem:[#allocation10 + $0x160] sm:$0xff]
    %v959 = vld [vmem:[#allocation10 + $0x168] sm:$0xff]
    %v960 = vld [vmem:[#allocation10 + $0x170] sm:$0xff]
    %v961 = vld [vmem:[#allocation10 + $0x178] sm:$0xff]
    %v962 = vld [vmem:[#allocation10 + $0x180] sm:$0xff]
    %v963 = vld [vmem:[#allocation10 + $0x188] sm:$0xff]
    %v964 = vld [vmem:[#allocation10 + $0x190] sm:$0xff]
    %v965 = vld [vmem:[#allocation10 + $0x198] sm:$0xff]
    %v966 = vld [vmem:[#allocation10 + $0x1a0] sm:$0xff]
    %v967 = vld [vmem:[#allocation10 + $0x1a8] sm:$0xff]
    %v968 = vld [vmem:[#allocation10 + $0x1b0] sm:$0xff]
    %v969 = vld [vmem:[#allocation10 + $0x1b8] sm:$0xff]
    %v970 = vld [vmem:[#allocation10 + $0x1c0] sm:$0xff]
    %v971 = vld [vmem:[#allocation10 + $0x1c8] sm:$0xff]
    %v972 = vld [vmem:[#allocation10 + $0x1d0] sm:$0xff]
    %v973 = vld [vmem:[#allocation10 + $0x1d8] sm:$0xff]
    %v974 = vld [vmem:[#allocation10 + $0x1e0] sm:$0xff]
    %v975 = vld [vmem:[#allocation10 + $0x1e8] sm:$0xff]
    %v976 = vld [vmem:[#allocation10 + $0x1f0] sm:$0xff]
    %v977 = vld [vmem:[#allocation10 + $0x1f8] sm:$0xff]
    %v978 = vld [vmem:[#allocation10 + $0x200] sm:$0xff]
    %v979 = vld [vmem:[#allocation10 + $0x208] sm:$0xff]
    %v980 = vld [vmem:[#allocation10 + $0x210] sm:$0xff]
    %v981 = vld [vmem:[#allocation10 + $0x218] sm:$0xff]
    %v982 = vld [vmem:[#allocation10 + $0x220] sm:$0xff]
    %v983 = vld [vmem:[#allocation10 + $0x228] sm:$0xff]
    %v984 = vld [vmem:[#allocation10 + $0x230] sm:$0xff]
    %v985 = vld [vmem:[#allocation10 + $0x238] sm:$0xff]
    %v986 = vld [vmem:[#allocation10 + $0x240] sm:$0xff]
    %v987 = vld [vmem:[#allocation10 + $0x248] sm:$0xff]
    %v988 = vld [vmem:[#allocation10 + $0x250] sm:$0xff]
    %v989 = vld [vmem:[#allocation10 + $0x258] sm:$0xff]
    %v990 = vld [vmem:[#allocation10 + $0x260] sm:$0xff]
    %v991 = vld [vmem:[#allocation10 + $0x268] sm:$0xff]
    %v992 = vld [vmem:[#allocation10 + $0x270] sm:$0xff]
    %v993 = vld [vmem:[#allocation10 + $0x278] sm:$0xff]
    %v994 = vld [vmem:[#allocation10 + $0x280] sm:$0xff]
    %v995 = vld [vmem:[#allocation10 + $0x288] sm:$0xff]
    %v996 = vld [vmem:[#allocation10 + $0x290] sm:$0xff]
    %v997 = vld [vmem:[#allocation10 + $0x298] sm:$0xff]
    %v998 = vld [vmem:[#allocation10 + $0x2a0] sm:$0xff]
    %v999 = vld [vmem:[#allocation10 + $0x2a8] sm:$0xff]
    %v1000 = vld [vmem:[#allocation10 + $0x2b0] sm:$0xff]
    %v1001 = vld [vmem:[#allocation10 + $0x2b8] sm:$0xff]
    %v1002 = vld [vmem:[#allocation10 + $0x2c0] sm:$0xff]
    %v1003 = vld [vmem:[#allocation10 + $0x2c8] sm:$0xff]
    %v1004 = vld [vmem:[#allocation10 + $0x2d0] sm:$0xff]
    %v1005 = vld [vmem:[#allocation10 + $0x2d8] sm:$0xff]
    %v1006 = vld [vmem:[#allocation10 + $0x2e0] sm:$0xff]
    %v1007 = vld [vmem:[#allocation10 + $0x2e8] sm:$0xff]
    %v1008 = vld [vmem:[#allocation10 + $0x2f0] sm:$0xff]
    %v1009 = vld [vmem:[#allocation10 + $0x2f8] sm:$0xff]
    %v1010 = vld [vmem:[#allocation10 + $0x300] sm:$0xff]
    %v1011 = vld [vmem:[#allocation10 + $0x308] sm:$0xff]
    %v1012 = vld [vmem:[#allocation10 + $0x310] sm:$0xff]
    %v1013 = vld [vmem:[#allocation10 + $0x318] sm:$0xff]
    %v1014 = vld [vmem:[#allocation10 + $0x320] sm:$0xff]
    %v1015 = vld [vmem:[#allocation10 + $0x328] sm:$0xff]
    %v1016 = vld [vmem:[#allocation10 + $0x330] sm:$0xff]
    %v1017 = vld [vmem:[#allocation10 + $0x338] sm:$0xff]
    %v1018 = vld [vmem:[#allocation10 + $0x340] sm:$0xff]
    %v1019 = vld [vmem:[#allocation10 + $0x348] sm:$0xff]
    %v1020 = vld [vmem:[#allocation10 + $0x350] sm:$0xff]
    %v1021 = vld [vmem:[#allocation10 + $0x358] sm:$0xff]
    %v1022 = vld [vmem:[#allocation10 + $0x360] sm:$0xff]
    %v1023 = vld [vmem:[#allocation10 + $0x368] sm:$0xff]
    %v1024 = vld [vmem:[#allocation10 + $0x370] sm:$0xff]
    %v1025 = vld [vmem:[#allocation10 + $0x378] sm:$0xff]
    %v1026 = vld [vmem:[#allocation10 + $0x380] sm:$0xff]
    %v1027 = vld [vmem:[#allocation10 + $0x388] sm:$0xff]
    %v1028 = vld [vmem:[#allocation10 + $0x390] sm:$0xff]
    %v1029 = vld [vmem:[#allocation10 + $0x398] sm:$0xff]
    %v1030 = vld [vmem:[#allocation10 + $0x3a0] sm:$0xff]
    %v1031 = vld [vmem:[#allocation10 + $0x3a8] sm:$0xff]
    %v1032 = vld [vmem:[#allocation10 + $0x3b0] sm:$0xff]
    %v1033 = vld [vmem:[#allocation10 + $0x3b8] sm:$0xff]
    %v1034 = vld [vmem:[#allocation10 + $0x3c0] sm:$0xff]
    %v1035 = vld [vmem:[#allocation10 + $0x3c8] sm:$0xff]
    %v1036 = vld [vmem:[#allocation10 + $0x3d0] sm:$0xff]
    %v1037 = vld [vmem:[#allocation10 + $0x3d8] sm:$0xff]
    %v1038 = vld [vmem:[#allocation10 + $0x3e0] sm:$0xff]
    %v1039 = vld [vmem:[#allocation10 + $0x3e8] sm:$0xff]
    %v1040 = vld [vmem:[#allocation10 + $0x3f0] sm:$0xff]
    %v1041 = vld [vmem:[#allocation10 + $0x3f8] sm:$0xff]
    %v1170 = vunpack.c.l.b16 %v914
    %v1171 = vunpack.c.h.b16 %v914
    %v1172 = vunpack.c.l.b16 %v915
    %v1173 = vunpack.c.h.b16 %v915
    %v1174 = vunpack.c.l.b16 %v916
    %v1175 = vunpack.c.h.b16 %v916
    %v1176 = vunpack.c.l.b16 %v917
    %v1177 = vunpack.c.h.b16 %v917
    %v1178 = vunpack.c.l.b16 %v918
    %v1179 = vunpack.c.h.b16 %v918
    %v1180 = vunpack.c.l.b16 %v919
    %v1181 = vunpack.c.h.b16 %v919
    %v1182 = vunpack.c.l.b16 %v920
    %v1183 = vunpack.c.h.b16 %v920
    %v1184 = vunpack.c.l.b16 %v921
    %v1185 = vunpack.c.h.b16 %v921
    %v1186 = vunpack.c.l.b16 %v922
    %v1187 = vunpack.c.h.b16 %v922
    %v1188 = vunpack.c.l.b16 %v923
    %v1189 = vunpack.c.h.b16 %v923
    %v1190 = vunpack.c.l.b16 %v924
    %v1191 = vunpack.c.h.b16 %v924
    %v1192 = vunpack.c.l.b16 %v925
    %v1193 = vunpack.c.h.b16 %v925
    %v1194 = vunpack.c.l.b16 %v926
    %v1195 = vunpack.c.h.b16 %v926
    %v1196 = vunpack.c.l.b16 %v927
    %v1197 = vunpack.c.h.b16 %v927
    %v1198 = vunpack.c.l.b16 %v928
    %v1199 = vunpack.c.h.b16 %v928
    %v1200 = vunpack.c.l.b16 %v929
    %v1201 = vunpack.c.h.b16 %v929
    %v1202 = vunpack.c.l.b16 %v930
    %v1203 = vunpack.c.h.b16 %v930
    %v1204 = vunpack.c.l.b16 %v931
    %v1205 = vunpack.c.h.b16 %v931
    %v1206 = vunpack.c.l.b16 %v932
    %v1207 = vunpack.c.h.b16 %v932
    %v1208 = vunpack.c.l.b16 %v933
    %v1209 = vunpack.c.h.b16 %v933
    %v1210 = vunpack.c.l.b16 %v934
    %v1211 = vunpack.c.h.b16 %v934
    %v1212 = vunpack.c.l.b16 %v935
    %v1213 = vunpack.c.h.b16 %v935
    %v1214 = vunpack.c.l.b16 %v936
    %v1215 = vunpack.c.h.b16 %v936
    %v1216 = vunpack.c.l.b16 %v937
    %v1217 = vunpack.c.h.b16 %v937
    %v1218 = vunpack.c.l.b16 %v938
    %v1219 = vunpack.c.h.b16 %v938
    %v1220 = vunpack.c.l.b16 %v939
    %v1221 = vunpack.c.h.b16 %v939
    %v1222 = vunpack.c.l.b16 %v940
    %v1223 = vunpack.c.h.b16 %v940
    %v1224 = vunpack.c.l.b16 %v941
    %v1225 = vunpack.c.h.b16 %v941
    %v1226 = vunpack.c.l.b16 %v942
    %v1227 = vunpack.c.h.b16 %v942
    %v1228 = vunpack.c.l.b16 %v943
    %v1229 = vunpack.c.h.b16 %v943
    %v1230 = vunpack.c.l.b16 %v944
    %v1231 = vunpack.c.h.b16 %v944
    %v1232 = vunpack.c.l.b16 %v945
    %v1233 = vunpack.c.h.b16 %v945
    %v1234 = vunpack.c.l.b16 %v946
    %v1235 = vunpack.c.h.b16 %v946
    %v1236 = vunpack.c.l.b16 %v947
    %v1237 = vunpack.c.h.b16 %v947
    %v1238 = vunpack.c.l.b16 %v948
    %v1239 = vunpack.c.h.b16 %v948
    %v1240 = vunpack.c.l.b16 %v949
    %v1241 = vunpack.c.h.b16 %v949
    %v1242 = vunpack.c.l.b16 %v950
    %v1243 = vunpack.c.h.b16 %v950
    %v1244 = vunpack.c.l.b16 %v951
    %v1245 = vunpack.c.h.b16 %v951
    %v1246 = vunpack.c.l.b16 %v952
    %v1247 = vunpack.c.h.b16 %v952
    %v1248 = vunpack.c.l.b16 %v953
    %v1249 = vunpack.c.h.b16 %v953
    %v1250 = vunpack.c.l.b16 %v954
    %v1251 = vunpack.c.h.b16 %v954
    %v1252 = vunpack.c.l.b16 %v955
    %v1253 = vunpack.c.h.b16 %v955
    %v1254 = vunpack.c.l.b16 %v956
    %v1255 = vunpack.c.h.b16 %v956
    %v1256 = vunpack.c.l.b16 %v957
    %v1257 = vunpack.c.h.b16 %v957
    %v1258 = vunpack.c.l.b16 %v958
    %v1259 = vunpack.c.h.b16 %v958
    %v1260 = vunpack.c.l.b16 %v959
    %v1261 = vunpack.c.h.b16 %v959
    %v1262 = vunpack.c.l.b16 %v960
    %v1263 = vunpack.c.h.b16 %v960
    %v1264 = vunpack.c.l.b16 %v961
    %v1265 = vunpack.c.h.b16 %v961
    %v1266 = vunpack.c.l.b16 %v962
    %v1267 = vunpack.c.h.b16 %v962
    %v1268 = vunpack.c.l.b16 %v963
    %v1269 = vunpack.c.h.b16 %v963
    %v1270 = vunpack.c.l.b16 %v964
    %v1271 = vunpack.c.h.b16 %v964
    %v1272 = vunpack.c.l.b16 %v965
    %v1273 = vunpack.c.h.b16 %v965
    %v1274 = vunpack.c.l.b16 %v966
    %v1275 = vunpack.c.h.b16 %v966
    %v1276 = vunpack.c.l.b16 %v967
    %v1277 = vunpack.c.h.b16 %v967
    %v1278 = vunpack.c.l.b16 %v968
    %v1279 = vunpack.c.h.b16 %v968
    %v1280 = vunpack.c.l.b16 %v969
    %v1281 = vunpack.c.h.b16 %v969
    %v1282 = vunpack.c.l.b16 %v970
    %v1283 = vunpack.c.h.b16 %v970
    %v1284 = vunpack.c.l.b16 %v971
    %v1285 = vunpack.c.h.b16 %v971
    %v1286 = vunpack.c.l.b16 %v972
    %v1287 = vunpack.c.h.b16 %v972
    %v1288 = vunpack.c.l.b16 %v973
    %v1289 = vunpack.c.h.b16 %v973
    %v1290 = vunpack.c.l.b16 %v974
    %v1291 = vunpack.c.h.b16 %v974
    %v1292 = vunpack.c.l.b16 %v975
    %v1293 = vunpack.c.h.b16 %v975
    %v1294 = vunpack.c.l.b16 %v976
    %v1295 = vunpack.c.h.b16 %v976
    %v1296 = vunpack.c.l.b16 %v977
    %v1297 = vunpack.c.h.b16 %v977
    %v1298 = vunpack.c.l.b16 %v978
    %v1299 = vunpack.c.h.b16 %v978
    %v1300 = vunpack.c.l.b16 %v979
    %v1301 = vunpack.c.h.b16 %v979
    %v1302 = vunpack.c.l.b16 %v980
    %v1303 = vunpack.c.h.b16 %v980
    %v1304 = vunpack.c.l.b16 %v981
    %v1305 = vunpack.c.h.b16 %v981
    %v1306 = vunpack.c.l.b16 %v982
    %v1307 = vunpack.c.h.b16 %v982
    %v1308 = vunpack.c.l.b16 %v983
    %v1309 = vunpack.c.h.b16 %v983
    %v1310 = vunpack.c.l.b16 %v984
    %v1311 = vunpack.c.h.b16 %v984
    %v1312 = vunpack.c.l.b16 %v985
    %v1313 = vunpack.c.h.b16 %v985
    %v1314 = vunpack.c.l.b16 %v986
    %v1315 = vunpack.c.h.b16 %v986
    %v1316 = vunpack.c.l.b16 %v987
    %v1317 = vunpack.c.h.b16 %v987
    %v1318 = vunpack.c.l.b16 %v988
    %v1319 = vunpack.c.h.b16 %v988
    %v1320 = vunpack.c.l.b16 %v989
    %v1321 = vunpack.c.h.b16 %v989
    %v1322 = vunpack.c.l.b16 %v990
    %v1323 = vunpack.c.h.b16 %v990
    %v1324 = vunpack.c.l.b16 %v991
    %v1325 = vunpack.c.h.b16 %v991
    %v1326 = vunpack.c.l.b16 %v992
    %v1327 = vunpack.c.h.b16 %v992
    %v1328 = vunpack.c.l.b16 %v993
    %v1329 = vunpack.c.h.b16 %v993
    %v1330 = vunpack.c.l.b16 %v994
    %v1331 = vunpack.c.h.b16 %v994
    %v1332 = vunpack.c.l.b16 %v995
    %v1333 = vunpack.c.h.b16 %v995
    %v1334 = vunpack.c.l.b16 %v996
    %v1335 = vunpack.c.h.b16 %v996
    %v1336 = vunpack.c.l.b16 %v997
    %v1337 = vunpack.c.h.b16 %v997
    %v1338 = vunpack.c.l.b16 %v998
    %v1339 = vunpack.c.h.b16 %v998
    %v1340 = vunpack.c.l.b16 %v999
    %v1341 = vunpack.c.h.b16 %v999
    %v1342 = vunpack.c.l.b16 %v1000
    %v1343 = vunpack.c.h.b16 %v1000
    %v1344 = vunpack.c.l.b16 %v1001
    %v1345 = vunpack.c.h.b16 %v1001
    %v1346 = vunpack.c.l.b16 %v1002
    %v1347 = vunpack.c.h.b16 %v1002
    %v1348 = vunpack.c.l.b16 %v1003
    %v1349 = vunpack.c.h.b16 %v1003
    %v1350 = vunpack.c.l.b16 %v1004
    %v1351 = vunpack.c.h.b16 %v1004
    %v1352 = vunpack.c.l.b16 %v1005
    %v1353 = vunpack.c.h.b16 %v1005
    %v1354 = vunpack.c.l.b16 %v1006
    %v1355 = vunpack.c.h.b16 %v1006
    %v1356 = vunpack.c.l.b16 %v1007
    %v1357 = vunpack.c.h.b16 %v1007
    %v1358 = vunpack.c.l.b16 %v1008
    %v1359 = vunpack.c.h.b16 %v1008
    %v1360 = vunpack.c.l.b16 %v1009
    %v1361 = vunpack.c.h.b16 %v1009
    %v1362 = vunpack.c.l.b16 %v1010
    %v1363 = vunpack.c.h.b16 %v1010
    %v1364 = vunpack.c.l.b16 %v1011
    %v1365 = vunpack.c.h.b16 %v1011
    %v1366 = vunpack.c.l.b16 %v1012
    %v1367 = vunpack.c.h.b16 %v1012
    %v1368 = vunpack.c.l.b16 %v1013
    %v1369 = vunpack.c.h.b16 %v1013
    %v1370 = vunpack.c.l.b16 %v1014
    %v1371 = vunpack.c.h.b16 %v1014
    %v1372 = vunpack.c.l.b16 %v1015
    %v1373 = vunpack.c.h.b16 %v1015
    %v1374 = vunpack.c.l.b16 %v1016
    %v1375 = vunpack.c.h.b16 %v1016
    %v1376 = vunpack.c.l.b16 %v1017
    %v1377 = vunpack.c.h.b16 %v1017
    %v1378 = vunpack.c.l.b16 %v1018
    %v1379 = vunpack.c.h.b16 %v1018
    %v1380 = vunpack.c.l.b16 %v1019
    %v1381 = vunpack.c.h.b16 %v1019
    %v1382 = vunpack.c.l.b16 %v1020
    %v1383 = vunpack.c.h.b16 %v1020
    %v1384 = vunpack.c.l.b16 %v1021
    %v1385 = vunpack.c.h.b16 %v1021
    %v1386 = vunpack.c.l.b16 %v1022
    %v1387 = vunpack.c.h.b16 %v1022
    %v1388 = vunpack.c.l.b16 %v1023
    %v1389 = vunpack.c.h.b16 %v1023
    %v1390 = vunpack.c.l.b16 %v1024
    %v1391 = vunpack.c.h.b16 %v1024
    %v1392 = vunpack.c.l.b16 %v1025
    %v1393 = vunpack.c.h.b16 %v1025
    %v1394 = vunpack.c.l.b16 %v1026
    %v1395 = vunpack.c.h.b16 %v1026
    %v1396 = vunpack.c.l.b16 %v1027
    %v1397 = vunpack.c.h.b16 %v1027
    %v1398 = vunpack.c.l.b16 %v1028
    %v1399 = vunpack.c.h.b16 %v1028
    %v1400 = vunpack.c.l.b16 %v1029
    %v1401 = vunpack.c.h.b16 %v1029
    %v1402 = vunpack.c.l.b16 %v1030
    %v1403 = vunpack.c.h.b16 %v1030
    %v1404 = vunpack.c.l.b16 %v1031
    %v1405 = vunpack.c.h.b16 %v1031
    %v1406 = vunpack.c.l.b16 %v1032
    %v1407 = vunpack.c.h.b16 %v1032
    %v1408 = vunpack.c.l.b16 %v1033
    %v1409 = vunpack.c.h.b16 %v1033
    %v1410 = vunpack.c.l.b16 %v1034
    %v1411 = vunpack.c.h.b16 %v1034
    %v1412 = vunpack.c.l.b16 %v1035
    %v1413 = vunpack.c.h.b16 %v1035
    %v1414 = vunpack.c.l.b16 %v1036
    %v1415 = vunpack.c.h.b16 %v1036
    %v1416 = vunpack.c.l.b16 %v1037
    %v1417 = vunpack.c.h.b16 %v1037
    %v1418 = vunpack.c.l.b16 %v1038
    %v1419 = vunpack.c.h.b16 %v1038
    %v1420 = vunpack.c.l.b16 %v1039
    %v1421 = vunpack.c.h.b16 %v1039
    %v1422 = vunpack.c.l.b16 %v1040
    %v1423 = vunpack.c.h.b16 %v1040
    %v1424 = vunpack.c.l.b16 %v1041
    %v1425 = vunpack.c.h.b16 %v1041
    %v1426 = vpack.c.b16 %v1172, %v1170
    %v1427 = vpack.c.b16 %v1173, %v1171
    %v1428 = vpack.c.b16 %v1176, %v1174
    %v1429 = vpack.c.b16 %v1177, %v1175
    %v1430 = vpack.c.b16 %v1180, %v1178
    %v1431 = vpack.c.b16 %v1181, %v1179
    %v1432 = vpack.c.b16 %v1184, %v1182
    %v1433 = vpack.c.b16 %v1185, %v1183
    %v1434 = vpack.c.b16 %v1188, %v1186
    %v1435 = vpack.c.b16 %v1189, %v1187
    %v1436 = vpack.c.b16 %v1192, %v1190
    %v1437 = vpack.c.b16 %v1193, %v1191
    %v1438 = vpack.c.b16 %v1196, %v1194
    %v1439 = vpack.c.b16 %v1197, %v1195
    %v1440 = vpack.c.b16 %v1200, %v1198
    %v1441 = vpack.c.b16 %v1201, %v1199
    %v1442 = vpack.c.b16 %v1204, %v1202
    %v1443 = vpack.c.b16 %v1205, %v1203
    %v1444 = vpack.c.b16 %v1208, %v1206
    %v1445 = vpack.c.b16 %v1209, %v1207
    %v1446 = vpack.c.b16 %v1212, %v1210
    %v1447 = vpack.c.b16 %v1213, %v1211
    %v1448 = vpack.c.b16 %v1216, %v1214
    %v1449 = vpack.c.b16 %v1217, %v1215
    %v1450 = vpack.c.b16 %v1220, %v1218
    %v1451 = vpack.c.b16 %v1221, %v1219
    %v1452 = vpack.c.b16 %v1224, %v1222
    %v1453 = vpack.c.b16 %v1225, %v1223
    %v1454 = vpack.c.b16 %v1228, %v1226
    %v1455 = vpack.c.b16 %v1229, %v1227
    %v1456 = vpack.c.b16 %v1232, %v1230
    %v1457 = vpack.c.b16 %v1233, %v1231
    %v1458 = vpack.c.b16 %v1236, %v1234
    %v1459 = vpack.c.b16 %v1237, %v1235
    %v1460 = vpack.c.b16 %v1240, %v1238
    %v1461 = vpack.c.b16 %v1241, %v1239
    %v1462 = vpack.c.b16 %v1244, %v1242
    %v1463 = vpack.c.b16 %v1245, %v1243
    %v1464 = vpack.c.b16 %v1248, %v1246
    %v1465 = vpack.c.b16 %v1249, %v1247
    %v1466 = vpack.c.b16 %v1252, %v1250
    %v1467 = vpack.c.b16 %v1253, %v1251
    %v1468 = vpack.c.b16 %v1256, %v1254
    %v1469 = vpack.c.b16 %v1257, %v1255
    %v1470 = vpack.c.b16 %v1260, %v1258
    %v1471 = vpack.c.b16 %v1261, %v1259
    %v1472 = vpack.c.b16 %v1264, %v1262
    %v1473 = vpack.c.b16 %v1265, %v1263
    %v1474 = vpack.c.b16 %v1268, %v1266
    %v1475 = vpack.c.b16 %v1269, %v1267
    %v1476 = vpack.c.b16 %v1272, %v1270
    %v1477 = vpack.c.b16 %v1273, %v1271
    %v1478 = vpack.c.b16 %v1276, %v1274
    %v1479 = vpack.c.b16 %v1277, %v1275
    %v1480 = vpack.c.b16 %v1280, %v1278
    %v1481 = vpack.c.b16 %v1281, %v1279
    %v1482 = vpack.c.b16 %v1284, %v1282
    %v1483 = vpack.c.b16 %v1285, %v1283
    %v1484 = vpack.c.b16 %v1288, %v1286
    %v1485 = vpack.c.b16 %v1289, %v1287
    %v1486 = vpack.c.b16 %v1292, %v1290
    %v1487 = vpack.c.b16 %v1293, %v1291
    %v1488 = vpack.c.b16 %v1296, %v1294
    %v1489 = vpack.c.b16 %v1297, %v1295
    %v1490 = vpack.c.b16 %v1300, %v1298
    %v1491 = vpack.c.b16 %v1301, %v1299
    %v1492 = vpack.c.b16 %v1304, %v1302
    %v1493 = vpack.c.b16 %v1305, %v1303
    %v1494 = vpack.c.b16 %v1308, %v1306
    %v1495 = vpack.c.b16 %v1309, %v1307
    %v1496 = vpack.c.b16 %v1312, %v1310
    %v1497 = vpack.c.b16 %v1313, %v1311
    %v1498 = vpack.c.b16 %v1316, %v1314
    %v1499 = vpack.c.b16 %v1317, %v1315
    %v1500 = vpack.c.b16 %v1320, %v1318
    %v1501 = vpack.c.b16 %v1321, %v1319
    %v1502 = vpack.c.b16 %v1324, %v1322
    %v1503 = vpack.c.b16 %v1325, %v1323
    %v1504 = vpack.c.b16 %v1328, %v1326
    %v1505 = vpack.c.b16 %v1329, %v1327
    %v1506 = vpack.c.b16 %v1332, %v1330
    %v1507 = vpack.c.b16 %v1333, %v1331
    %v1508 = vpack.c.b16 %v1336, %v1334
    %v1509 = vpack.c.b16 %v1337, %v1335
    %v1510 = vpack.c.b16 %v1340, %v1338
    %v1511 = vpack.c.b16 %v1341, %v1339
    %v1512 = vpack.c.b16 %v1344, %v1342
    %v1513 = vpack.c.b16 %v1345, %v1343
    %v1514 = vpack.c.b16 %v1348, %v1346
    %v1515 = vpack.c.b16 %v1349, %v1347
    %v1516 = vpack.c.b16 %v1352, %v1350
    %v1517 = vpack.c.b16 %v1353, %v1351
    %v1518 = vpack.c.b16 %v1356, %v1354
    %v1519 = vpack.c.b16 %v1357, %v1355
    %v1520 = vpack.c.b16 %v1360, %v1358
    %v1521 = vpack.c.b16 %v1361, %v1359
    %v1522 = vpack.c.b16 %v1364, %v1362
    %v1523 = vpack.c.b16 %v1365, %v1363
    %v1524 = vpack.c.b16 %v1368, %v1366
    %v1525 = vpack.c.b16 %v1369, %v1367
    %v1526 = vpack.c.b16 %v1372, %v1370
    %v1527 = vpack.c.b16 %v1373, %v1371
    %v1528 = vpack.c.b16 %v1376, %v1374
    %v1529 = vpack.c.b16 %v1377, %v1375
    %v1530 = vpack.c.b16 %v1380, %v1378
    %v1531 = vpack.c.b16 %v1381, %v1379
    %v1532 = vpack.c.b16 %v1384, %v1382
    %v1533 = vpack.c.b16 %v1385, %v1383
    %v1534 = vpack.c.b16 %v1388, %v1386
    %v1535 = vpack.c.b16 %v1389, %v1387
    %v1536 = vpack.c.b16 %v1392, %v1390
    %v1537 = vpack.c.b16 %v1393, %v1391
    %v1538 = vpack.c.b16 %v1396, %v1394
    %v1539 = vpack.c.b16 %v1397, %v1395
    %v1540 = vpack.c.b16 %v1400, %v1398
    %v1541 = vpack.c.b16 %v1401, %v1399
    %v1542 = vpack.c.b16 %v1404, %v1402
    %v1543 = vpack.c.b16 %v1405, %v1403
    %v1544 = vpack.c.b16 %v1408, %v1406
    %v1545 = vpack.c.b16 %v1409, %v1407
    %v1546 = vpack.c.b16 %v1412, %v1410
    %v1547 = vpack.c.b16 %v1413, %v1411
    %v1548 = vpack.c.b16 %v1416, %v1414
    %v1549 = vpack.c.b16 %v1417, %v1415
    %v1550 = vpack.c.b16 %v1420, %v1418
    %v1551 = vpack.c.b16 %v1421, %v1419
    %v1552 = vpack.c.b16 %v1424, %v1422
    %v1553 = vpack.c.b16 %v1425, %v1423
    %1682 = vmatprep.subr.bf16.mxu0 %v1441
    %1683 = vmatpush1.bf16.msra.mxu0 %v1440
    %1684 = vmatprep.subr.bf16.mxu0 %v1439
    %1685 = vmatpush1.bf16.msra.mxu0 %v1438
    %1686 = vmatprep.subr.bf16.mxu0 %v1437
    %1687 = vmatpush1.bf16.msra.mxu0 %v1436
    %1688 = vmatprep.subr.bf16.mxu0 %v1435
    %1689 = vmatpush1.bf16.msra.mxu0 %v1434
    %1690 = vmatprep.subr.bf16.mxu0 %v1433
    %1691 = vmatpush1.bf16.msra.mxu0 %v1432
    %1692 = vmatprep.subr.bf16.mxu0 %v1431
    %1693 = vmatpush1.bf16.msra.mxu0 %v1430
    %1694 = vmatprep.subr.bf16.mxu0 %v1429
    %1695 = vmatpush1.bf16.msra.mxu0 %v1428
    %1696 = vmatprep.subr.bf16.mxu0 %v1427
    %1697 = vmatpush1.bf16.msra.mxu0 %v1426
    %1698 = vmatprep.subr.bf16.mxu0 %v1457
    %1699 = vmatpush2.bf16.msra.mxu0 %v1456
    %1700 = vmatprep.subr.bf16.mxu0 %v1455
    %1701 = vmatpush2.bf16.msra.mxu0 %v1454
    %1702 = vmatprep.subr.bf16.mxu0 %v1453
    %1703 = vmatpush2.bf16.msra.mxu0 %v1452
    %1704 = vmatprep.subr.bf16.mxu0 %v1451
    %1705 = vmatpush2.bf16.msra.mxu0 %v1450
    %1706 = vmatprep.subr.bf16.mxu0 %v1449
    %1707 = vmatpush2.bf16.msra.mxu0 %v1448
    %1708 = vmatprep.subr.bf16.mxu0 %v1447
    %1709 = vmatpush2.bf16.msra.mxu0 %v1446
    %1710 = vmatprep.subr.bf16.mxu0 %v1445
    %1711 = vmatpush2.bf16.msra.mxu0 %v1444
    %1712 = vmatprep.subr.bf16.mxu0 %v1443
    %1713 = vmatpush2.bf16.msra.mxu0 %v1442
    %1714 = vmatprep.mubr.bf16.mxu0 %v907
    %1715 = vmatmul.mubr.bf16.gmra.mxu0 %v906
    %v1716 = vpop.f32.mrf.mxu0
    %v1717 = vadd.f32 0.0, %v1716
    %v1718 = vpop.f32.mrf.mxu0
    %v1719 = vadd.f32 0.0, %v1718
    %v1720 = vpop.f32.mrf.mxu0
    %v1721 = vpop.f32.mrf.mxu0
    %1722 = vdwg.mxu0
    %1723 = vmatprep.subr.bf16.mxu0 %v1473
    %1724 = vmatpush1.bf16.msra.mxu0 %v1472
    %1725 = vmatprep.subr.bf16.mxu0 %v1471
    %1726 = vmatpush1.bf16.msra.mxu0 %v1470
    %1727 = vmatprep.subr.bf16.mxu0 %v1469
    %1728 = vmatpush1.bf16.msra.mxu0 %v1468
    %1729 = vmatprep.subr.bf16.mxu0 %v1467
    %1730 = vmatpush1.bf16.msra.mxu0 %v1466
    %1731 = vmatprep.subr.bf16.mxu0 %v1465
    %1732 = vmatpush1.bf16.msra.mxu0 %v1464
    %1733 = vmatprep.subr.bf16.mxu0 %v1463
    %1734 = vmatpush1.bf16.msra.mxu0 %v1462
    %1735 = vmatprep.subr.bf16.mxu0 %v1461
    %1736 = vmatpush1.bf16.msra.mxu0 %v1460
    %1737 = vmatprep.subr.bf16.mxu0 %v1459
    %1738 = vmatpush1.bf16.msra.mxu0 %v1458
    %1739 = vmatprep.subr.bf16.mxu0 %v1489
    %1740 = vmatpush2.bf16.msra.mxu0 %v1488
    %1741 = vmatprep.subr.bf16.mxu0 %v1487
    %1742 = vmatpush2.bf16.msra.mxu0 %v1486
    %1743 = vmatprep.subr.bf16.mxu0 %v1485
    %1744 = vmatpush2.bf16.msra.mxu0 %v1484
    %1745 = vmatprep.subr.bf16.mxu0 %v1483
    %1746 = vmatpush2.bf16.msra.mxu0 %v1482
    %1747 = vmatprep.subr.bf16.mxu0 %v1481
    %1748 = vmatpush2.bf16.msra.mxu0 %v1480
    %1749 = vmatprep.subr.bf16.mxu0 %v1479
    %1750 = vmatpush2.bf16.msra.mxu0 %v1478
    %1751 = vmatprep.subr.bf16.mxu0 %v1477
    %1752 = vmatpush2.bf16.msra.mxu0 %v1476
    %1753 = vmatprep.subr.bf16.mxu0 %v1475
    %1754 = vmatpush2.bf16.msra.mxu0 %v1474
    %1755 = vmatprep.mubr.bf16.mxu0 %v909
    %1756 = vmatmul.mubr.bf16.gmra.mxu0 %v908
    %v1757 = vpop.f32.mrf.mxu0
    %v1758 = vadd.f32 %v1717, %v1757
    %v1759 = vpop.f32.mrf.mxu0
    %v1760 = vadd.f32 %v1719, %v1759
    %v1761 = vpop.f32.mrf.mxu0
    %v1762 = vpop.f32.mrf.mxu0
    %1763 = vdwg.mxu0
    %1764 = vmatprep.subr.bf16.mxu0 %v1505
    %1765 = vmatpush1.bf16.msra.mxu0 %v1504
    %1766 = vmatprep.subr.bf16.mxu0 %v1503
    %1767 = vmatpush1.bf16.msra.mxu0 %v1502
    %1768 = vmatprep.subr.bf16.mxu0 %v1501
    %1769 = vmatpush1.bf16.msra.mxu0 %v1500
    %1770 = vmatprep.subr.bf16.mxu0 %v1499
    %1771 = vmatpush1.bf16.msra.mxu0 %v1498
    %1772 = vmatprep.subr.bf16.mxu0 %v1497
    %1773 = vmatpush1.bf16.msra.mxu0 %v1496
    %1774 = vmatprep.subr.bf16.mxu0 %v1495
    %1775 = vmatpush1.bf16.msra.mxu0 %v1494
    %1776 = vmatprep.subr.bf16.mxu0 %v1493
    %1777 = vmatpush1.bf16.msra.mxu0 %v1492
    %1778 = vmatprep.subr.bf16.mxu0 %v1491
    %1779 = vmatpush1.bf16.msra.mxu0 %v1490
    %1780 = vmatprep.subr.bf16.mxu0 %v1521
    %1781 = vmatpush2.bf16.msra.mxu0 %v1520
    %1782 = vmatprep.subr.bf16.mxu0 %v1519
    %1783 = vmatpush2.bf16.msra.mxu0 %v1518
    %1784 = vmatprep.subr.bf16.mxu0 %v1517
    %1785 = vmatpush2.bf16.msra.mxu0 %v1516
    %1786 = vmatprep.subr.bf16.mxu0 %v1515
    %1787 = vmatpush2.bf16.msra.mxu0 %v1514
    %1788 = vmatprep.subr.bf16.mxu0 %v1513
    %1789 = vmatpush2.bf16.msra.mxu0 %v1512
    %1790 = vmatprep.subr.bf16.mxu0 %v1511
    %1791 = vmatpush2.bf16.msra.mxu0 %v1510
    %1792 = vmatprep.subr.bf16.mxu0 %v1509
    %1793 = vmatpush2.bf16.msra.mxu0 %v1508
    %1794 = vmatprep.subr.bf16.mxu0 %v1507
    %1795 = vmatpush2.bf16.msra.mxu0 %v1506
    %1796 = vmatprep.mubr.bf16.mxu0 %v911
    %1797 = vmatmul.mubr.bf16.gmra.mxu0 %v910
    %v1798 = vpop.f32.mrf.mxu0
    %v1799 = vadd.f32 %v1758, %v1798
    %v1800 = vpop.f32.mrf.mxu0
    %v1801 = vadd.f32 %v1760, %v1800
    %v1802 = vpop.f32.mrf.mxu0
    %v1803 = vpop.f32.mrf.mxu0
    %1804 = vdwg.mxu0
    %1805 = vmatprep.subr.bf16.mxu0 %v1537
    %1806 = vmatpush1.bf16.msra.mxu0 %v1536
    %1807 = vmatprep.subr.bf16.mxu0 %v1535
    %1808 = vmatpush1.bf16.msra.mxu0 %v1534
    %1809 = vmatprep.subr.bf16.mxu0 %v1533
    %1810 = vmatpush1.bf16.msra.mxu0 %v1532
    %1811 = vmatprep.subr.bf16.mxu0 %v1531
    %1812 = vmatpush1.bf16.msra.mxu0 %v1530
    %1813 = vmatprep.subr.bf16.mxu0 %v1529
    %1814 = vmatpush1.bf16.msra.mxu0 %v1528
    %1815 = vmatprep.subr.bf16.mxu0 %v1527
    %1816 = vmatpush1.bf16.msra.mxu0 %v1526
    %1817 = vmatprep.subr.bf16.mxu0 %v1525
    %1818 = vmatpush1.bf16.msra.mxu0 %v1524
    %1819 = vmatprep.subr.bf16.mxu0 %v1523
    %1820 = vmatpush1.bf16.msra.mxu0 %v1522
    %1821 = vmatprep.subr.bf16.mxu0 %v1553
    %1822 = vmatpush2.bf16.msra.mxu0 %v1552
    %1823 = vmatprep.subr.bf16.mxu0 %v1551
    %1824 = vmatpush2.bf16.msra.mxu0 %v1550
    %1825 = vmatprep.subr.bf16.mxu0 %v1549
    %1826 = vmatpush2.bf16.msra.mxu0 %v1548
    %1827 = vmatprep.subr.bf16.mxu0 %v1547
    %1828 = vmatpush2.bf16.msra.mxu0 %v1546
    %1829 = vmatprep.subr.bf16.mxu0 %v1545
    %1830 = vmatpush2.bf16.msra.mxu0 %v1544
    %1831 = vmatprep.subr.bf16.mxu0 %v1543
    %1832 = vmatpush2.bf16.msra.mxu0 %v1542
    %1833 = vmatprep.subr.bf16.mxu0 %v1541
    %1834 = vmatpush2.bf16.msra.mxu0 %v1540
    %1835 = vmatprep.subr.bf16.mxu0 %v1539
    %1836 = vmatpush2.bf16.msra.mxu0 %v1538
    %1837 = vmatprep.mubr.bf16.mxu0 %v913
    %1838 = vmatmul.mubr.bf16.gmra.mxu0 %v912
    %v1839 = vpop.f32.mrf.mxu0
    %v1840 = vadd.f32 %v1799, %v1839
    %v1841 = vpop.f32.mrf.mxu0
    %v1842 = vadd.f32 %v1801, %v1841
    %v1843 = vpop.f32.mrf.mxu0
    %v1844 = vpop.f32.mrf.mxu0
    %1845 = vdwg.mxu0
    %v1846 = vrot.slane %v1840, 4
    %v1847 = vadd.f32 %v1840, %v1846
    %v1848 = vrot.slane %v1847, 2
    %v1849 = vadd.f32 %v1847, %v1848
    %v1850 = vrot.slane %v1849, 1
    %v1851 = vadd.f32 %v1849, %v1850
    %v1852 = vrot.slane %v1842, 4
    %v1853 = vadd.f32 %v1842, %v1852
    %v1854 = vrot.slane %v1853, 2
    %v1855 = vadd.f32 %v1853, %v1854
    %v1856 = vrot.slane %v1855, 1
    %v1857 = vadd.f32 %v1855, %v1856
    %v1858 = vmul.f32 %v1851, 0.125
    %v1859 = vmul.f32 %v1857, 0.125
    %v1860 = vsub.f32 %v1840, %v1858
    %v1861 = vsub.f32 %v1842, %v1859
    %v1862 = vmul.f32 %v1860, %v1860
    %v1863 = vmul.f32 %v1861, %v1861
    %v1864 = vrot.slane %v1862, 4
    %v1865 = vadd.f32 %v1862, %v1864
    %v1866 = vrot.slane %v1865, 2
    %v1867 = vadd.f32 %v1865, %v1866
    %v1868 = vrot.slane %v1867, 1
    %v1869 = vadd.f32 %v1867, %v1868
    %v1870 = vrot.slane %v1863, 4
    %v1871 = vadd.f32 %v1863, %v1870
    %v1872 = vrot.slane %v1871, 2
    %v1873 = vadd.f32 %v1871, %v1872
    %v1874 = vrot.slane %v1873, 1
    %v1875 = vadd.f32 %v1873, %v1874
    %v1876 = vmul.f32 %v1869, 0.125
    %v1877 = vmul.f32 %v1875, 0.125
    %v1878 = vld [vmem:[%s5] sm:$0x3]
    %v1879 = vld [vmem:[%s6] sm:$0x3]
    %v1880 = vadd.f32 %v1876, 1e-05
    %v1881 = vadd.f32 %v1877, 1e-05
    %v1882 = vrsqrt.pop %v1880
    %v1883 = vrsqrt.pop %v1881
    %v1884 = vmul.f32 %v1860, %v1882
    %v1885 = vmul.f32 %v1861, %v1883
    %v1887 = vlaneseq
    %v1888 = vshrl.u32 %v1887, 7
    %v1889 = vsub.s32 0, %v1888
    %v1890 = vrot.slane %v1878, %v1889
    %v1891 = vlaneseq
    %v1892 = vshrl.u32 %v1891, 7
    %v1893 = vsub.s32 1, %v1892
    %v1894 = vrot.slane %v1878, %v1893
    %v1897 = vmul.f32 %v1884, %v1890
    %v1898 = vmul.f32 %v1885, %v1894
    %v1900 = vlaneseq
    %v1901 = vshrl.u32 %v1900, 7
    %v1902 = vsub.s32 0, %v1901
    %v1903 = vrot.slane %v1879, %v1902
    %v1904 = vlaneseq
    %v1905 = vshrl.u32 %v1904, 7
    %v1906 = vsub.s32 1, %v1905
    %v1907 = vrot.slane %v1879, %v1906
    %v1910 = vadd.f32 %v1897, %v1903
    %v1911 = vadd.f32 %v1898, %v1907
    %v1912 = vmax.f32 %v1910, 0.0
    %v1913 = vmax.f32 %v1911, 0.0
    %v1914 = vld [vmem:[%s7] sm:$0x3]
    %v1915 = vunpack.c.l.bf16 %v1914
    %v1917 = vlaneseq
    %v1918 = vshrl.u32 %v1917, 7
    %v1919 = vsub.s32 0, %v1918
    %v1920 = vrot.slane %v1915, %v1919
    %v1921 = vlaneseq
    %v1922 = vshrl.u32 %v1921, 7
    %v1923 = vsub.s32 2, %v1922
    %v1924 = vrot.slane %v1915, %v1923
    %v1927 = vlaneseq
    %v1928 = vshrl.u32 %v1927, 7
    %v1929 = vsub.s32 0, %v1928
    %v1930 = vrot.slane %v1920, %v1929
    %v1931 = vlaneseq
    %v1932 = vshrl.u32 %v1931, 7
    %v1933 = vsub.s32 0, %v1932
    %v1934 = vrot.slane %v1924, %v1933
    %v1935 = vmul.f32 %v1912, %v1930
    %v1936 = vmul.f32 %v1913, %v1934
    %v1937 = vadd.f32 %v1935, %v1936
    %1938 = vadd.xlane.f32.xlu0 %v1937
    %v1939 = vpop.xlane.xlu0 %1938
    %s1940 = sld [smem:[#allocation2]]
    %v1941 = vstv %s1940
    %v1942 = vadd.f32 %v1939, %v1941
    %vm1943 = vcmask 7168
    %1944 = vst.msk [vmem:[%s9] sm:$0xff] %vm1943, %v1942
    // Predicated region
    $region58: #{tpu_custom_call.1} parent=1 // pred_check
      _
    $region59: #{tpu_custom_call.1} parent=1 // pred_check_branch
      %1946 = sbr.rel (0) target = $region61
    $region60: #{tpu_custom_call.1} parent=1 // pred_region
      _
    $region61: #{tpu_custom_call.1} parent=1 // pred_fallthru
      _
    // Predicated region
    $region62: #{tpu_custom_call.1} parent=1 // pred_check
      _
    $region63: #{tpu_custom_call.1} parent=1 // pred_check_branch
      %1948 = sbr.rel (0) target = $region65
    $region64: #{tpu_custom_call.1} parent=1 // pred_region
      _
    $region65: #{tpu_custom_call.1} parent=1 // pred_fallthru
      _
    %1949 = vsyncpa [#allocation4], 1
    %1950 = vsyncpa [#allocation6], 1
    %1951 = vsyncpa [#allocation9], 1

</llo_original>
